<compile_context>
chip_gen: v5e
topology: v5e:2x2
jax: 0.10.0
libtpu: 0.0.40
codegen_flags: <defaults>
</compile_context>

<pallas_src>
import math
from functools import partial

import jax
import jax.numpy as jnp
from jax.experimental import pallas as pl
from jax.experimental.pallas import tpu as pltpu

# ----------------------------- tiny "RoBERTa" config -----------------------------
VOCAB = 100
MAX_POS = 64
HIDDEN = 32
NUM_HEADS = 4
HEAD_DIM = HIDDEN // NUM_HEADS
INTERMEDIATE = 64
NUM_LAYERS = 2
NUM_LABELS = 2  # hateful / not-hateful
LN_EPS = 1e-12

VEC_W = max(HIDDEN, INTERMEDIATE)  # packed vector-parameter row width
VEC_ROWS = 16                      # 10 used rows, padded to a sublane multiple


# ----------------------------- in-kernel helpers -----------------------------
def _layernorm(x, gamma, beta):
    mean = jnp.mean(x, axis=-1, keepdims=True)
    cent = x - mean
    var = jnp.mean(cent * cent, axis=-1, keepdims=True)
    return cent * jax.lax.rsqrt(var + LN_EPS) * gamma + beta


def _gelu(x):
    # TODO(synk): tanh-approx GELU; PyTorch/HF default is erf-GELU (~1e-3 difference).
    c = 0.7978845608028654  # sqrt(2/pi)
    return 0.5 * x * (1.0 + jnp.tanh(c * (x + 0.044715 * x * x * x)))


# ----------------------------- fused encoder kernel -----------------------------
def _roberta_fused_kernel(
    # inputs (all whole-array VMEM refs; no grid)
    x_emb_ref,    # (T, H)            word+pos+type embedding sum
    bias_ref,     # (T, T)            block-diagonal attention bias (precomputed)
    onehot_ref,   # (B, NUM_LABELS)   one-hot labels (zeros if no labels)
    emb_ln_ref,   # (2, H)            embedding LayerNorm gamma / beta
    clf_w_ref,    # (H, NUM_LABELS)
    clf_b_ref,    # (1, NUM_LABELS)
    wqkv_ref,     # (L, H, 3H)        fused [wq|wk|wv]
    wo_ref,       # (L, H, H)
    w1_ref,       # (L, H, INTERMEDIATE)
    w2_ref,       # (L, INTERMEDIATE, H)
    vec_ref,      # (L, VEC_ROWS, VEC_W)  packed biases / LN params
    # outputs
    logits_ref,   # (B, NUM_LABELS)
    loss_ref,     # (1, 1)
    *, batch, seq, num_heads, head_dim, num_layers, scale,
):
    H = num_heads * head_dim

    # ---- embedding LayerNorm (activations stay as values for the whole body) ----
    x = _layernorm(x_emb_ref[...], emb_ln_ref[0:1, :], emb_ln_ref[1:2, :])   # (T, H)

    # ---- loop-invariant attention bias (merged-batch block-diagonal + padding) ----
    bias = bias_ref[...]                                                     # (T, T)

    # ---- statically unrolled encoder layer loop ----
    for l in range(num_layers):
        wqkv = wqkv_ref[l]            # (H, 3H)
        wo = wo_ref[l]                # (H, H)
        w1 = w1_ref[l]                # (H, I)
        w2 = w2_ref[l]                # (I, H)
        vec = vec_ref[l]              # (VEC_ROWS, VEC_W)
        bq = vec[0:1, 0:H]
        bk = vec[1:2, 0:H]
        bv = vec[2:3, 0:H]
        bo = vec[3:4, 0:H]
        ln1_g = vec[4:5, 0:H]
        ln1_b = vec[5:6, 0:H]
        b1 = vec[6:7, 0:INTERMEDIATE]
        b2 = vec[7:8, 0:H]
        ln2_g = vec[8:9, 0:H]
        ln2_b = vec[9:10, 0:H]

        # fused QKV projection: one matmul against [wq|wk|wv]
        qkv = jnp.dot(x, wqkv, preferred_element_type=jnp.float32)           # (T, 3H)
        q = qkv[:, 0:H] + bq
        k = qkv[:, H:2 * H] + bk
        v = qkv[:, 2 * H:3 * H] + bv

        # merged-batch attention: one score + one PV matmul per head
        ctx_heads = []
        for h_i in range(num_heads):
            c0 = h_i * head_dim
            c1 = c0 + head_dim
            qh = q[:, c0:c1]                                                 # (T, D)
            kh = k[:, c0:c1]
            vh = v[:, c0:c1]
            s = jnp.dot(qh, kh.T, preferred_element_type=jnp.float32) * scale + bias
            m = jnp.max(s, axis=-1, keepdims=True)
            p = jnp.exp(s - m)
            p = p * pl.reciprocal(jnp.sum(p, axis=-1, keepdims=True), approx=True)
            ctx_heads.append(jnp.dot(p, vh, preferred_element_type=jnp.float32))
        ctx = jnp.concatenate(ctx_heads, axis=-1)                            # (T, H)

        # output projection + residual LayerNorm
        attn_out = jnp.dot(ctx, wo, preferred_element_type=jnp.float32) + bo
        x1 = _layernorm(attn_out + x, ln1_g, ln1_b)

        # feed-forward + residual LayerNorm
        h = _gelu(jnp.dot(x1, w1, preferred_element_type=jnp.float32) + b1)
        ffn = jnp.dot(h, w2, preferred_element_type=jnp.float32) + b2
        x = _layernorm(ffn + x1, ln2_g, ln2_b)

    # ---- classifier head on CLS tokens (dropout = identity in eval mode) ----
    cls = jnp.concatenate([x[b_i * seq:b_i * seq + 1, :] for b_i in range(batch)], axis=0)
    logits = (jnp.dot(cls, clf_w_ref[...], preferred_element_type=jnp.float32)
              + clf_b_ref[...])
    logits_ref[...] = logits

    # ---- mean cross-entropy loss ----
    m = jnp.max(logits, axis=-1, keepdims=True)
    lse = m + jnp.log(jnp.sum(jnp.exp(logits - m), axis=-1, keepdims=True))
    picked = jnp.sum(onehot_ref[...] * logits, axis=-1, keepdims=True)
    loss_ref[...] = jnp.mean(lse - picked).reshape(1, 1)


def roberta_fused_call(x_emb, bias, onehot, emb_ln, clf_w, clf_b, wqkv, wo, w1, w2, vecs):
    B = onehot.shape[0]
    T = x_emb.shape[0]
    S = T // B
    num_layers = wqkv.shape[0]
    kernel = partial(
        _roberta_fused_kernel,
        batch=B, seq=S, num_heads=NUM_HEADS, head_dim=HEAD_DIM,
        num_layers=num_layers, scale=1.0 / math.sqrt(HEAD_DIM),
    )
    n_inputs = 11
    logits, loss = pl.pallas_call(
        kernel,
        out_shape=(
            jax.ShapeDtypeStruct((B, NUM_LABELS), jnp.float32),
            jax.ShapeDtypeStruct((1, 1), jnp.float32),
        ),
        # no grid: everything (activations + all layers' weights, <<1 MiB) is
        # whole-array VMEM-resident; no pipelining, single launch.
        in_specs=[pl.BlockSpec(memory_space=pltpu.MemorySpace.VMEM)
                  for _ in range(n_inputs)],
        out_specs=(pl.BlockSpec(memory_space=pltpu.MemorySpace.VMEM),
                   pl.BlockSpec(memory_space=pltpu.MemorySpace.VMEM)),
    )(x_emb, bias, onehot, emb_ln, clf_w, clf_b, wqkv, wo, w1, w2, vecs)
    return logits, loss


# ----------------------------- parameters -----------------------------
def init_params(key):
    def nrm(k, shape, scale=0.02):
        return (scale * jax.random.normal(k, shape)).astype(jnp.float32)

    keys = jax.random.split(key, 4 + NUM_LAYERS)
    params = {
        "word_emb": nrm(keys[0], (VOCAB, HIDDEN)),
        "pos_emb": nrm(keys[1], (MAX_POS, HIDDEN)),
        "type_emb": nrm(keys[2], (2, HIDDEN)),
        "emb_ln_g": jnp.ones((HIDDEN,), jnp.float32),
        "emb_ln_b": jnp.zeros((HIDDEN,), jnp.float32),
        "clf_w": nrm(keys[3], (HIDDEN, NUM_LABELS)),
        "clf_b": jnp.zeros((NUM_LABELS,), jnp.float32),
        "layers": [],
    }
    for l in range(NUM_LAYERS):
        lk = jax.random.split(keys[4 + l], 6)
        params["layers"].append({
            "wq": nrm(lk[0], (HIDDEN, HIDDEN)), "bq": jnp.zeros((HIDDEN,), jnp.float32),
            "wk": nrm(lk[1], (HIDDEN, HIDDEN)), "bk": jnp.zeros((HIDDEN,), jnp.float32),
            "wv": nrm(lk[2], (HIDDEN, HIDDEN)), "bv": jnp.zeros((HIDDEN,), jnp.float32),
            "wo": nrm(lk[3], (HIDDEN, HIDDEN)), "bo": jnp.zeros((HIDDEN,), jnp.float32),
            "attn_ln_g": jnp.ones((HIDDEN,), jnp.float32),
            "attn_ln_b": jnp.zeros((HIDDEN,), jnp.float32),
            "w1": nrm(lk[4], (HIDDEN, INTERMEDIATE)), "b1": jnp.zeros((INTERMEDIATE,), jnp.float32),
            "w2": nrm(lk[5], (INTERMEDIATE, HIDDEN)), "b2": jnp.zeros((HIDDEN,), jnp.float32),
            "ffn_ln_g": jnp.ones((HIDDEN,), jnp.float32),
            "ffn_ln_b": jnp.zeros((HIDDEN,), jnp.float32),
        })
    return params


def pack_params(params):
    """Pack per-layer weights into stacked (L, ...) slabs kept fully VMEM-resident."""
    emb_ln = jnp.stack([params["emb_ln_g"], params["emb_ln_b"]], axis=0)        # (2, H)
    clf_w = params["clf_w"]                                                     # (H, NL)
    clf_b = params["clf_b"].reshape(1, NUM_LABELS)

    wqkv_l, wo_l, w1_l, w2_l, vec_l = [], [], [], [], []
    for layer in params["layers"]:
        wqkv_l.append(jnp.concatenate([layer["wq"], layer["wk"], layer["wv"]], axis=1))
        wo_l.append(layer["wo"])
        w1_l.append(layer["w1"])
        w2_l.append(layer["w2"])
        rows = [layer["bq"], layer["bk"], layer["bv"], layer["bo"],
                layer["attn_ln_g"], layer["attn_ln_b"],
                layer["b1"], layer["b2"],
                layer["ffn_ln_g"], layer["ffn_ln_b"]]
        rows = [jnp.pad(r, (0, VEC_W - r.shape[0])) for r in rows]
        vec = jnp.stack(rows, axis=0)                                           # (10, VEC_W)
        vec = jnp.pad(vec, ((0, VEC_ROWS - vec.shape[0]), (0, 0)))              # (VEC_ROWS, VEC_W)
        vec_l.append(vec)

    wqkv = jnp.stack(wqkv_l, axis=0)     # (L, H, 3H)
    wo = jnp.stack(wo_l, axis=0)         # (L, H, H)
    w1 = jnp.stack(w1_l, axis=0)         # (L, H, I)
    w2 = jnp.stack(w2_l, axis=0)         # (L, I, H)
    vecs = jnp.stack(vec_l, axis=0)      # (L, VEC_ROWS, VEC_W)
    return emb_ln, clf_w, clf_b, wqkv, wo, w1, w2, vecs


# ----------------------------- forward pass -----------------------------
def forward(params, input_ids, attention_mask=None, token_type_ids=None, labels=None):
    B, S = input_ids.shape
    if attention_mask is None:
        attention_mask = jnp.ones((B, S), jnp.int32)
    if token_type_ids is None:
        token_type_ids = jnp.zeros((B, S), jnp.int32)

    # --- embeddings (gather is glue; LayerNorm runs inside the fused kernel) ---
    # TODO(synk): RoBERTa proper offsets position ids by padding_idx+1; BERT-style used here.
    positions = jnp.arange(S)
    x_emb = (params["word_emb"][input_ids]
             + params["pos_emb"][positions][None, :, :]
             + params["type_emb"][token_type_ids])
    x_emb = x_emb.reshape(B * S, HIDDEN).astype(jnp.float32)

    # --- merged-batch block-diagonal attention bias (hoisted out of the kernel) ---
    T = B * S
    batch_ids = jnp.repeat(jnp.arange(B), S)                                  # (T,)
    same_batch = (batch_ids[:, None] == batch_ids[None, :]).astype(jnp.float32)
    key_mask = attention_mask.astype(jnp.float32).reshape(T)
    allowed = same_batch * key_mask[None, :]                                  # (T, T)
    bias = (1.0 - allowed) * (-1e9)

    if labels is not None:
        onehot = jax.nn.one_hot(labels.reshape(-1), NUM_LABELS, dtype=jnp.float32)
    else:
        onehot = jnp.zeros((B, NUM_LABELS), jnp.float32)

    emb_ln, clf_w, clf_b, wqkv, wo, w1, w2, vecs = pack_params(params)

    logits, loss = roberta_fused_call(
        x_emb, bias, onehot, emb_ln, clf_w, clf_b, wqkv, wo, w1, w2, vecs)

    out = {"logits": logits}
    if labels is not None:
        out["loss"] = loss[0, 0]
    return out


# ----------------------------- main -----------------------------
if __name__ == "__main__":
    key = jax.random.PRNGKey(0)
    pkey, ikey, lkey = jax.random.split(key, 3)

    params = init_params(pkey)

    B, S = 2, 8
    input_ids = jax.random.randint(ikey, (B, S), 0, VOCAB, dtype=jnp.int32)
    attention_mask = jnp.ones((B, S), jnp.int32)
    token_type_ids = jnp.zeros((B, S), jnp.int32)
    labels = jax.random.randint(lkey, (B,), 0, NUM_LABELS, dtype=jnp.int32)

    out = forward(params, input_ids, attention_mask, token_type_ids, labels)
    jax.block_until_ready(out["logits"])
    jax.block_until_ready(out["loss"])

    assert out["logits"].shape == (B, NUM_LABELS)
    assert out["loss"].shape == ()
    print("KERNEL_OK")
</pallas_src>

<mosaic_0001>
module attributes {stable_mosaic.version = 11 : i64} {
  func.func @_roberta_fused_kernel(%arg0: memref<16x32xf32, #tpu.memory_space<vmem>>, %arg1: memref<16x16xf32, #tpu.memory_space<vmem>>, %arg2: memref<2x2xf32, #tpu.memory_space<vmem>>, %arg3: memref<2x32xf32, #tpu.memory_space<vmem>>, %arg4: memref<32x2xf32, #tpu.memory_space<vmem>>, %arg5: memref<1x2xf32, #tpu.memory_space<vmem>>, %arg6: memref<2x32x96xf32, #tpu.memory_space<vmem>>, %arg7: memref<2x32x32xf32, #tpu.memory_space<vmem>>, %arg8: memref<2x32x64xf32, #tpu.memory_space<vmem>>, %arg9: memref<2x64x32xf32, #tpu.memory_space<vmem>>, %arg10: memref<2x16x64xf32, #tpu.memory_space<vmem>>, %arg11: memref<2x2xf32, #tpu.memory_space<vmem>>, %arg12: memref<1x1xf32, #tpu.memory_space<vmem>>) attributes {dimension_semantics = [], scalar_prefetch = 0 : i64, scratch_operands = 0 : i64, tpu.core_type = #tpu.core_type<tc>} {
    %c0 = arith.constant 0 : index
    %c0_0 = arith.constant 0 : index
    %0 = vector.load %arg0[%c0, %c0_0] : memref<16x32xf32, #tpu.memory_space<vmem>>, vector<16x32xf32>
    %c0_1 = arith.constant 0 : index
    %c0_2 = arith.constant 0 : index
    %1 = vector.load %arg3[%c0_1, %c0_2] : memref<2x32xf32, #tpu.memory_space<vmem>>, vector<1x32xf32>
    %c1 = arith.constant 1 : index
    %c0_3 = arith.constant 0 : index
    %2 = vector.load %arg3[%c1, %c0_3] : memref<2x32xf32, #tpu.memory_space<vmem>>, vector<1x32xf32>
    %cst = arith.constant dense<0.000000e+00> : vector<16xf32>
    %3 = vector.multi_reduction <add>, %0, %cst [1] : vector<16x32xf32> to vector<16xf32>
    %4 = vector.shape_cast %3 : vector<16xf32> to vector<16x1xf32>
    %cst_4 = arith.constant 3.200000e+01 : f32
    %5 = vector.broadcast %cst_4 : f32 to vector<16x1xf32>
    %6 = arith.divf %4, %5 : vector<16x1xf32>
    %7 = vector.broadcast %6 : vector<16x1xf32> to vector<16x32xf32>
    %8 = arith.subf %0, %7 : vector<16x32xf32>
    %9 = arith.mulf %8, %8 : vector<16x32xf32>
    %cst_5 = arith.constant dense<0.000000e+00> : vector<16xf32>
    %10 = vector.multi_reduction <add>, %9, %cst_5 [1] : vector<16x32xf32> to vector<16xf32>
    %11 = vector.shape_cast %10 : vector<16xf32> to vector<16x1xf32>
    %cst_6 = arith.constant 3.200000e+01 : f32
    %12 = vector.broadcast %cst_6 : f32 to vector<16x1xf32>
    %13 = arith.divf %11, %12 : vector<16x1xf32>
    %cst_7 = arith.constant 9.99999996E-13 : f32
    %14 = vector.broadcast %cst_7 : f32 to vector<16x1xf32>
    %15 = arith.addf %13, %14 : vector<16x1xf32>
    %16 = math.rsqrt %15 : vector<16x1xf32>
    %17 = vector.broadcast %16 : vector<16x1xf32> to vector<16x32xf32>
    %18 = arith.mulf %8, %17 : vector<16x32xf32>
    %19 = vector.broadcast %1 : vector<1x32xf32> to vector<16x32xf32>
    %20 = arith.mulf %18, %19 : vector<16x32xf32>
    %21 = vector.broadcast %2 : vector<1x32xf32> to vector<16x32xf32>
    %22 = arith.addf %20, %21 : vector<16x32xf32>
    %c0_8 = arith.constant 0 : index
    %c0_9 = arith.constant 0 : index
    %23 = vector.load %arg1[%c0_8, %c0_9] : memref<16x16xf32, #tpu.memory_space<vmem>>, vector<16x16xf32>
    %c0_10 = arith.constant 0 : index
    %c0_11 = arith.constant 0 : index
    %c0_12 = arith.constant 0 : index
    %24 = vector.load %arg6[%c0_10, %c0_11, %c0_12] : memref<2x32x96xf32, #tpu.memory_space<vmem>>, vector<1x32x96xf32>
    %25 = vector.shape_cast %24 : vector<1x32x96xf32> to vector<32x96xf32>
    %c0_13 = arith.constant 0 : index
    %c0_14 = arith.constant 0 : index
    %c0_15 = arith.constant 0 : index
    %26 = vector.load %arg7[%c0_13, %c0_14, %c0_15] : memref<2x32x32xf32, #tpu.memory_space<vmem>>, vector<1x32x32xf32>
    %27 = vector.shape_cast %26 : vector<1x32x32xf32> to vector<32x32xf32>
    %c0_16 = arith.constant 0 : index
    %c0_17 = arith.constant 0 : index
    %c0_18 = arith.constant 0 : index
    %28 = vector.load %arg8[%c0_16, %c0_17, %c0_18] : memref<2x32x64xf32, #tpu.memory_space<vmem>>, vector<1x32x64xf32>
    %29 = vector.shape_cast %28 : vector<1x32x64xf32> to vector<32x64xf32>
    %c0_19 = arith.constant 0 : index
    %c0_20 = arith.constant 0 : index
    %c0_21 = arith.constant 0 : index
    %30 = vector.load %arg9[%c0_19, %c0_20, %c0_21] : memref<2x64x32xf32, #tpu.memory_space<vmem>>, vector<1x64x32xf32>
    %31 = vector.shape_cast %30 : vector<1x64x32xf32> to vector<64x32xf32>
    %c0_22 = arith.constant 0 : index
    %c0_23 = arith.constant 0 : index
    %c0_24 = arith.constant 0 : index
    %32 = vector.load %arg10[%c0_22, %c0_23, %c0_24] : memref<2x16x64xf32, #tpu.memory_space<vmem>>, vector<1x16x64xf32>
    %33 = vector.shape_cast %32 : vector<1x16x64xf32> to vector<16x64xf32>
    %34 = vector.extract_strided_slice %33 {offsets = [0, 0], sizes = [1, 32], strides = [1, 1]} : vector<16x64xf32> to vector<1x32xf32>
    %35 = vector.extract_strided_slice %33 {offsets = [1, 0], sizes = [1, 32], strides = [1, 1]} : vector<16x64xf32> to vector<1x32xf32>
    %36 = vector.extract_strided_slice %33 {offsets = [2, 0], sizes = [1, 32], strides = [1, 1]} : vector<16x64xf32> to vector<1x32xf32>
    %37 = vector.extract_strided_slice %33 {offsets = [3, 0], sizes = [1, 32], strides = [1, 1]} : vector<16x64xf32> to vector<1x32xf32>
    %38 = vector.extract_strided_slice %33 {offsets = [4, 0], sizes = [1, 32], strides = [1, 1]} : vector<16x64xf32> to vector<1x32xf32>
    %39 = vector.extract_strided_slice %33 {offsets = [5, 0], sizes = [1, 32], strides = [1, 1]} : vector<16x64xf32> to vector<1x32xf32>
    %40 = vector.extract_strided_slice %33 {offsets = [6, 0], sizes = [1, 64], strides = [1, 1]} : vector<16x64xf32> to vector<1x64xf32>
    %41 = vector.extract_strided_slice %33 {offsets = [7, 0], sizes = [1, 32], strides = [1, 1]} : vector<16x64xf32> to vector<1x32xf32>
    %42 = vector.extract_strided_slice %33 {offsets = [8, 0], sizes = [1, 32], strides = [1, 1]} : vector<16x64xf32> to vector<1x32xf32>
    %43 = vector.extract_strided_slice %33 {offsets = [9, 0], sizes = [1, 32], strides = [1, 1]} : vector<16x64xf32> to vector<1x32xf32>
    %cst_25 = arith.constant dense<0.000000e+00> : vector<16x96xf32>
    %44 = tpu.matmul %22, %25, %cst_25 {dimension_numbers = #tpu.dot_dimension_numbers<[1], [0], [0], [1], [0, 0, 1, 1], [], []>} : vector<16x32xf32>, vector<32x96xf32>, vector<16x96xf32> -> vector<16x96xf32>
    %45 = vector.extract_strided_slice %44 {offsets = [0, 0], sizes = [16, 32], strides = [1, 1]} : vector<16x96xf32> to vector<16x32xf32>
    %46 = vector.broadcast %34 : vector<1x32xf32> to vector<16x32xf32>
    %47 = arith.addf %45, %46 : vector<16x32xf32>
    %48 = vector.extract_strided_slice %44 {offsets = [0, 32], sizes = [16, 32], strides = [1, 1]} : vector<16x96xf32> to vector<16x32xf32>
    %49 = vector.broadcast %35 : vector<1x32xf32> to vector<16x32xf32>
    %50 = arith.addf %48, %49 : vector<16x32xf32>
    %51 = vector.extract_strided_slice %44 {offsets = [0, 64], sizes = [16, 32], strides = [1, 1]} : vector<16x96xf32> to vector<16x32xf32>
    %52 = vector.broadcast %36 : vector<1x32xf32> to vector<16x32xf32>
    %53 = arith.addf %51, %52 : vector<16x32xf32>
    %54 = vector.extract_strided_slice %47 {offsets = [0, 0], sizes = [16, 8], strides = [1, 1]} : vector<16x32xf32> to vector<16x8xf32>
    %55 = vector.extract_strided_slice %50 {offsets = [0, 0], sizes = [16, 8], strides = [1, 1]} : vector<16x32xf32> to vector<16x8xf32>
    %56 = vector.extract_strided_slice %53 {offsets = [0, 0], sizes = [16, 8], strides = [1, 1]} : vector<16x32xf32> to vector<16x8xf32>
    %57 = tpu.transpose %55, [1, 0] : vector<16x8xf32> -> vector<8x16xf32>
    %cst_26 = arith.constant dense<0.000000e+00> : vector<16x16xf32>
    %58 = tpu.matmul %54, %57, %cst_26 {dimension_numbers = #tpu.dot_dimension_numbers<[1], [0], [0], [1], [0, 0, 1, 1], [], []>} : vector<16x8xf32>, vector<8x16xf32>, vector<16x16xf32> -> vector<16x16xf32>
    %cst_27 = arith.constant 0.353553385 : f32
    %59 = vector.broadcast %cst_27 : f32 to vector<16x16xf32>
    %60 = arith.mulf %58, %59 : vector<16x16xf32>
    %61 = arith.addf %60, %23 : vector<16x16xf32>
    %cst_28 = arith.constant dense<0xFF800000> : vector<16xf32>
    %62 = vector.multi_reduction <maximumf>, %61, %cst_28 [1] : vector<16x16xf32> to vector<16xf32>
    %63 = vector.shape_cast %62 : vector<16xf32> to vector<16x1xf32>
    %64 = vector.broadcast %63 : vector<16x1xf32> to vector<16x16xf32>
    %65 = arith.subf %61, %64 : vector<16x16xf32>
    %66 = math.exp %65 : vector<16x16xf32>
    %cst_29 = arith.constant dense<0.000000e+00> : vector<16xf32>
    %67 = vector.multi_reduction <add>, %66, %cst_29 [1] : vector<16x16xf32> to vector<16xf32>
    %68 = vector.shape_cast %67 : vector<16xf32> to vector<16x1xf32>
    %69 = tpu.reciprocal %68 {approx = true} : vector<16x1xf32> -> vector<16x1xf32>
    %70 = vector.broadcast %69 : vector<16x1xf32> to vector<16x16xf32>
    %71 = arith.mulf %66, %70 : vector<16x16xf32>
    %cst_30 = arith.constant dense<0.000000e+00> : vector<16x8xf32>
    %72 = tpu.matmul %71, %56, %cst_30 {dimension_numbers = #tpu.dot_dimension_numbers<[1], [0], [0], [1], [0, 0, 1, 1], [], []>} : vector<16x16xf32>, vector<16x8xf32>, vector<16x8xf32> -> vector<16x8xf32>
    %73 = vector.extract_strided_slice %47 {offsets = [0, 8], sizes = [16, 8], strides = [1, 1]} : vector<16x32xf32> to vector<16x8xf32>
    %74 = vector.extract_strided_slice %50 {offsets = [0, 8], sizes = [16, 8], strides = [1, 1]} : vector<16x32xf32> to vector<16x8xf32>
    %75 = vector.extract_strided_slice %53 {offsets = [0, 8], sizes = [16, 8], strides = [1, 1]} : vector<16x32xf32> to vector<16x8xf32>
    %76 = tpu.transpose %74, [1, 0] : vector<16x8xf32> -> vector<8x16xf32>
    %cst_31 = arith.constant dense<0.000000e+00> : vector<16x16xf32>
    %77 = tpu.matmul %73, %76, %cst_31 {dimension_numbers = #tpu.dot_dimension_numbers<[1], [0], [0], [1], [0, 0, 1, 1], [], []>} : vector<16x8xf32>, vector<8x16xf32>, vector<16x16xf32> -> vector<16x16xf32>
    %cst_32 = arith.constant 0.353553385 : f32
    %78 = vector.broadcast %cst_32 : f32 to vector<16x16xf32>
    %79 = arith.mulf %77, %78 : vector<16x16xf32>
    %80 = arith.addf %79, %23 : vector<16x16xf32>
    %cst_33 = arith.constant dense<0xFF800000> : vector<16xf32>
    %81 = vector.multi_reduction <maximumf>, %80, %cst_33 [1] : vector<16x16xf32> to vector<16xf32>
    %82 = vector.shape_cast %81 : vector<16xf32> to vector<16x1xf32>
    %83 = vector.broadcast %82 : vector<16x1xf32> to vector<16x16xf32>
    %84 = arith.subf %80, %83 : vector<16x16xf32>
    %85 = math.exp %84 : vector<16x16xf32>
    %cst_34 = arith.constant dense<0.000000e+00> : vector<16xf32>
    %86 = vector.multi_reduction <add>, %85, %cst_34 [1] : vector<16x16xf32> to vector<16xf32>
    %87 = vector.shape_cast %86 : vector<16xf32> to vector<16x1xf32>
    %88 = tpu.reciprocal %87 {approx = true} : vector<16x1xf32> -> vector<16x1xf32>
    %89 = vector.broadcast %88 : vector<16x1xf32> to vector<16x16xf32>
    %90 = arith.mulf %85, %89 : vector<16x16xf32>
    %cst_35 = arith.constant dense<0.000000e+00> : vector<16x8xf32>
    %91 = tpu.matmul %90, %75, %cst_35 {dimension_numbers = #tpu.dot_dimension_numbers<[1], [0], [0], [1], [0, 0, 1, 1], [], []>} : vector<16x16xf32>, vector<16x8xf32>, vector<16x8xf32> -> vector<16x8xf32>
    %92 = vector.extract_strided_slice %47 {offsets = [0, 16], sizes = [16, 8], strides = [1, 1]} : vector<16x32xf32> to vector<16x8xf32>
    %93 = vector.extract_strided_slice %50 {offsets = [0, 16], sizes = [16, 8], strides = [1, 1]} : vector<16x32xf32> to vector<16x8xf32>
    %94 = vector.extract_strided_slice %53 {offsets = [0, 16], sizes = [16, 8], strides = [1, 1]} : vector<16x32xf32> to vector<16x8xf32>
    %95 = tpu.transpose %93, [1, 0] : vector<16x8xf32> -> vector<8x16xf32>
    %cst_36 = arith.constant dense<0.000000e+00> : vector<16x16xf32>
    %96 = tpu.matmul %92, %95, %cst_36 {dimension_numbers = #tpu.dot_dimension_numbers<[1], [0], [0], [1], [0, 0, 1, 1], [], []>} : vector<16x8xf32>, vector<8x16xf32>, vector<16x16xf32> -> vector<16x16xf32>
    %cst_37 = arith.constant 0.353553385 : f32
    %97 = vector.broadcast %cst_37 : f32 to vector<16x16xf32>
    %98 = arith.mulf %96, %97 : vector<16x16xf32>
    %99 = arith.addf %98, %23 : vector<16x16xf32>
    %cst_38 = arith.constant dense<0xFF800000> : vector<16xf32>
    %100 = vector.multi_reduction <maximumf>, %99, %cst_38 [1] : vector<16x16xf32> to vector<16xf32>
    %101 = vector.shape_cast %100 : vector<16xf32> to vector<16x1xf32>
    %102 = vector.broadcast %101 : vector<16x1xf32> to vector<16x16xf32>
    %103 = arith.subf %99, %102 : vector<16x16xf32>
    %104 = math.exp %103 : vector<16x16xf32>
    %cst_39 = arith.constant dense<0.000000e+00> : vector<16xf32>
    %105 = vector.multi_reduction <add>, %104, %cst_39 [1] : vector<16x16xf32> to vector<16xf32>
    %106 = vector.shape_cast %105 : vector<16xf32> to vector<16x1xf32>
    %107 = tpu.reciprocal %106 {approx = true} : vector<16x1xf32> -> vector<16x1xf32>
    %108 = vector.broadcast %107 : vector<16x1xf32> to vector<16x16xf32>
    %109 = arith.mulf %104, %108 : vector<16x16xf32>
    %cst_40 = arith.constant dense<0.000000e+00> : vector<16x8xf32>
    %110 = tpu.matmul %109, %94, %cst_40 {dimension_numbers = #tpu.dot_dimension_numbers<[1], [0], [0], [1], [0, 0, 1, 1], [], []>} : vector<16x16xf32>, vector<16x8xf32>, vector<16x8xf32> -> vector<16x8xf32>
    %111 = vector.extract_strided_slice %47 {offsets = [0, 24], sizes = [16, 8], strides = [1, 1]} : vector<16x32xf32> to vector<16x8xf32>
    %112 = vector.extract_strided_slice %50 {offsets = [0, 24], sizes = [16, 8], strides = [1, 1]} : vector<16x32xf32> to vector<16x8xf32>
    %113 = vector.extract_strided_slice %53 {offsets = [0, 24], sizes = [16, 8], strides = [1, 1]} : vector<16x32xf32> to vector<16x8xf32>
    %114 = tpu.transpose %112, [1, 0] : vector<16x8xf32> -> vector<8x16xf32>
    %cst_41 = arith.constant dense<0.000000e+00> : vector<16x16xf32>
    %115 = tpu.matmul %111, %114, %cst_41 {dimension_numbers = #tpu.dot_dimension_numbers<[1], [0], [0], [1], [0, 0, 1, 1], [], []>} : vector<16x8xf32>, vector<8x16xf32>, vector<16x16xf32> -> vector<16x16xf32>
    %cst_42 = arith.constant 0.353553385 : f32
    %116 = vector.broadcast %cst_42 : f32 to vector<16x16xf32>
    %117 = arith.mulf %115, %116 : vector<16x16xf32>
    %118 = arith.addf %117, %23 : vector<16x16xf32>
    %cst_43 = arith.constant dense<0xFF800000> : vector<16xf32>
    %119 = vector.multi_reduction <maximumf>, %118, %cst_43 [1] : vector<16x16xf32> to vector<16xf32>
    %120 = vector.shape_cast %119 : vector<16xf32> to vector<16x1xf32>
    %121 = vector.broadcast %120 : vector<16x1xf32> to vector<16x16xf32>
    %122 = arith.subf %118, %121 : vector<16x16xf32>
    %123 = math.exp %122 : vector<16x16xf32>
    %cst_44 = arith.constant dense<0.000000e+00> : vector<16xf32>
    %124 = vector.multi_reduction <add>, %123, %cst_44 [1] : vector<16x16xf32> to vector<16xf32>
    %125 = vector.shape_cast %124 : vector<16xf32> to vector<16x1xf32>
    %126 = tpu.reciprocal %125 {approx = true} : vector<16x1xf32> -> vector<16x1xf32>
    %127 = vector.broadcast %126 : vector<16x1xf32> to vector<16x16xf32>
    %128 = arith.mulf %123, %127 : vector<16x16xf32>
    %cst_45 = arith.constant dense<0.000000e+00> : vector<16x8xf32>
    %129 = tpu.matmul %128, %113, %cst_45 {dimension_numbers = #tpu.dot_dimension_numbers<[1], [0], [0], [1], [0, 0, 1, 1], [], []>} : vector<16x16xf32>, vector<16x8xf32>, vector<16x8xf32> -> vector<16x8xf32>
    %130 = tpu.concatenate %72, %91, %110, %129 in 1 : vector<16x8xf32>, vector<16x8xf32>, vector<16x8xf32>, vector<16x8xf32> -> vector<16x32xf32>
    %cst_46 = arith.constant dense<0.000000e+00> : vector<16x32xf32>
    %131 = tpu.matmul %130, %27, %cst_46 {dimension_numbers = #tpu.dot_dimension_numbers<[1], [0], [0], [1], [0, 0, 1, 1], [], []>} : vector<16x32xf32>, vector<32x32xf32>, vector<16x32xf32> -> vector<16x32xf32>
    %132 = vector.broadcast %37 : vector<1x32xf32> to vector<16x32xf32>
    %133 = arith.addf %131, %132 : vector<16x32xf32>
    %134 = arith.addf %133, %22 : vector<16x32xf32>
    %cst_47 = arith.constant dense<0.000000e+00> : vector<16xf32>
    %135 = vector.multi_reduction <add>, %134, %cst_47 [1] : vector<16x32xf32> to vector<16xf32>
    %136 = vector.shape_cast %135 : vector<16xf32> to vector<16x1xf32>
    %cst_48 = arith.constant 3.200000e+01 : f32
    %137 = vector.broadcast %cst_48 : f32 to vector<16x1xf32>
    %138 = arith.divf %136, %137 : vector<16x1xf32>
    %139 = vector.broadcast %138 : vector<16x1xf32> to vector<16x32xf32>
    %140 = arith.subf %134, %139 : vector<16x32xf32>
    %141 = arith.mulf %140, %140 : vector<16x32xf32>
    %cst_49 = arith.constant dense<0.000000e+00> : vector<16xf32>
    %142 = vector.multi_reduction <add>, %141, %cst_49 [1] : vector<16x32xf32> to vector<16xf32>
    %143 = vector.shape_cast %142 : vector<16xf32> to vector<16x1xf32>
    %cst_50 = arith.constant 3.200000e+01 : f32
    %144 = vector.broadcast %cst_50 : f32 to vector<16x1xf32>
    %145 = arith.divf %143, %144 : vector<16x1xf32>
    %cst_51 = arith.constant 9.99999996E-13 : f32
    %146 = vector.broadcast %cst_51 : f32 to vector<16x1xf32>
    %147 = arith.addf %145, %146 : vector<16x1xf32>
    %148 = math.rsqrt %147 : vector<16x1xf32>
    %149 = vector.broadcast %148 : vector<16x1xf32> to vector<16x32xf32>
    %150 = arith.mulf %140, %149 : vector<16x32xf32>
    %151 = vector.broadcast %38 : vector<1x32xf32> to vector<16x32xf32>
    %152 = arith.mulf %150, %151 : vector<16x32xf32>
    %153 = vector.broadcast %39 : vector<1x32xf32> to vector<16x32xf32>
    %154 = arith.addf %152, %153 : vector<16x32xf32>
    %cst_52 = arith.constant dense<0.000000e+00> : vector<16x64xf32>
    %155 = tpu.matmul %154, %29, %cst_52 {dimension_numbers = #tpu.dot_dimension_numbers<[1], [0], [0], [1], [0, 0, 1, 1], [], []>} : vector<16x32xf32>, vector<32x64xf32>, vector<16x64xf32> -> vector<16x64xf32>
    %156 = vector.broadcast %40 : vector<1x64xf32> to vector<16x64xf32>
    %157 = arith.addf %155, %156 : vector<16x64xf32>
    %cst_53 = arith.constant 5.000000e-01 : f32
    %158 = vector.broadcast %cst_53 : f32 to vector<16x64xf32>
    %159 = arith.mulf %158, %157 : vector<16x64xf32>
    %cst_54 = arith.constant 4.471500e-02 : f32
    %160 = vector.broadcast %cst_54 : f32 to vector<16x64xf32>
    %161 = arith.mulf %160, %157 : vector<16x64xf32>
    %162 = arith.mulf %161, %157 : vector<16x64xf32>
    %163 = arith.mulf %162, %157 : vector<16x64xf32>
    %164 = arith.addf %157, %163 : vector<16x64xf32>
    %cst_55 = arith.constant 0.797884583 : f32
    %165 = vector.broadcast %cst_55 : f32 to vector<16x64xf32>
    %166 = arith.mulf %165, %164 : vector<16x64xf32>
    %167 = math.tanh %166 : vector<16x64xf32>
    %cst_56 = arith.constant 1.000000e+00 : f32
    %168 = vector.broadcast %cst_56 : f32 to vector<16x64xf32>
    %169 = arith.addf %168, %167 : vector<16x64xf32>
    %170 = arith.mulf %159, %169 : vector<16x64xf32>
    %cst_57 = arith.constant dense<0.000000e+00> : vector<16x32xf32>
    %171 = tpu.matmul %170, %31, %cst_57 {dimension_numbers = #tpu.dot_dimension_numbers<[1], [0], [0], [1], [0, 0, 1, 1], [], []>} : vector<16x64xf32>, vector<64x32xf32>, vector<16x32xf32> -> vector<16x32xf32>
    %172 = vector.broadcast %41 : vector<1x32xf32> to vector<16x32xf32>
    %173 = arith.addf %171, %172 : vector<16x32xf32>
    %174 = arith.addf %173, %154 : vector<16x32xf32>
    %cst_58 = arith.constant dense<0.000000e+00> : vector<16xf32>
    %175 = vector.multi_reduction <add>, %174, %cst_58 [1] : vector<16x32xf32> to vector<16xf32>
    %176 = vector.shape_cast %175 : vector<16xf32> to vector<16x1xf32>
    %cst_59 = arith.constant 3.200000e+01 : f32
    %177 = vector.broadcast %cst_59 : f32 to vector<16x1xf32>
    %178 = arith.divf %176, %177 : vector<16x1xf32>
    %179 = vector.broadcast %178 : vector<16x1xf32> to vector<16x32xf32>
    %180 = arith.subf %174, %179 : vector<16x32xf32>
    %181 = arith.mulf %180, %180 : vector<16x32xf32>
    %cst_60 = arith.constant dense<0.000000e+00> : vector<16xf32>
    %182 = vector.multi_reduction <add>, %181, %cst_60 [1] : vector<16x32xf32> to vector<16xf32>
    %183 = vector.shape_cast %182 : vector<16xf32> to vector<16x1xf32>
    %cst_61 = arith.constant 3.200000e+01 : f32
    %184 = vector.broadcast %cst_61 : f32 to vector<16x1xf32>
    %185 = arith.divf %183, %184 : vector<16x1xf32>
    %cst_62 = arith.constant 9.99999996E-13 : f32
    %186 = vector.broadcast %cst_62 : f32 to vector<16x1xf32>
    %187 = arith.addf %185, %186 : vector<16x1xf32>
    %188 = math.rsqrt %187 : vector<16x1xf32>
    %189 = vector.broadcast %188 : vector<16x1xf32> to vector<16x32xf32>
    %190 = arith.mulf %180, %189 : vector<16x32xf32>
    %191 = vector.broadcast %42 : vector<1x32xf32> to vector<16x32xf32>
    %192 = arith.mulf %190, %191 : vector<16x32xf32>
    %193 = vector.broadcast %43 : vector<1x32xf32> to vector<16x32xf32>
    %194 = arith.addf %192, %193 : vector<16x32xf32>
    %c1_63 = arith.constant 1 : index
    %c0_64 = arith.constant 0 : index
    %c0_65 = arith.constant 0 : index
    %195 = vector.load %arg6[%c1_63, %c0_64, %c0_65] : memref<2x32x96xf32, #tpu.memory_space<vmem>>, vector<1x32x96xf32>
    %196 = vector.shape_cast %195 : vector<1x32x96xf32> to vector<32x96xf32>
    %c1_66 = arith.constant 1 : index
    %c0_67 = arith.constant 0 : index
    %c0_68 = arith.constant 0 : index
    %197 = vector.load %arg7[%c1_66, %c0_67, %c0_68] : memref<2x32x32xf32, #tpu.memory_space<vmem>>, vector<1x32x32xf32>
    %198 = vector.shape_cast %197 : vector<1x32x32xf32> to vector<32x32xf32>
    %c1_69 = arith.constant 1 : index
    %c0_70 = arith.constant 0 : index
    %c0_71 = arith.constant 0 : index
    %199 = vector.load %arg8[%c1_69, %c0_70, %c0_71] : memref<2x32x64xf32, #tpu.memory_space<vmem>>, vector<1x32x64xf32>
    %200 = vector.shape_cast %199 : vector<1x32x64xf32> to vector<32x64xf32>
    %c1_72 = arith.constant 1 : index
    %c0_73 = arith.constant 0 : index
    %c0_74 = arith.constant 0 : index
    %201 = vector.load %arg9[%c1_72, %c0_73, %c0_74] : memref<2x64x32xf32, #tpu.memory_space<vmem>>, vector<1x64x32xf32>
    %202 = vector.shape_cast %201 : vector<1x64x32xf32> to vector<64x32xf32>
    %c1_75 = arith.constant 1 : index
    %c0_76 = arith.constant 0 : index
    %c0_77 = arith.constant 0 : index
    %203 = vector.load %arg10[%c1_75, %c0_76, %c0_77] : memref<2x16x64xf32, #tpu.memory_space<vmem>>, vector<1x16x64xf32>
    %204 = vector.shape_cast %203 : vector<1x16x64xf32> to vector<16x64xf32>
    %205 = vector.extract_strided_slice %204 {offsets = [0, 0], sizes = [1, 32], strides = [1, 1]} : vector<16x64xf32> to vector<1x32xf32>
    %206 = vector.extract_strided_slice %204 {offsets = [1, 0], sizes = [1, 32], strides = [1, 1]} : vector<16x64xf32> to vector<1x32xf32>
    %207 = vector.extract_strided_slice %204 {offsets = [2, 0], sizes = [1, 32], strides = [1, 1]} : vector<16x64xf32> to vector<1x32xf32>
    %208 = vector.extract_strided_slice %204 {offsets = [3, 0], sizes = [1, 32], strides = [1, 1]} : vector<16x64xf32> to vector<1x32xf32>
    %209 = vector.extract_strided_slice %204 {offsets = [4, 0], sizes = [1, 32], strides = [1, 1]} : vector<16x64xf32> to vector<1x32xf32>
    %210 = vector.extract_strided_slice %204 {offsets = [5, 0], sizes = [1, 32], strides = [1, 1]} : vector<16x64xf32> to vector<1x32xf32>
    %211 = vector.extract_strided_slice %204 {offsets = [6, 0], sizes = [1, 64], strides = [1, 1]} : vector<16x64xf32> to vector<1x64xf32>
    %212 = vector.extract_strided_slice %204 {offsets = [7, 0], sizes = [1, 32], strides = [1, 1]} : vector<16x64xf32> to vector<1x32xf32>
    %213 = vector.extract_strided_slice %204 {offsets = [8, 0], sizes = [1, 32], strides = [1, 1]} : vector<16x64xf32> to vector<1x32xf32>
    %214 = vector.extract_strided_slice %204 {offsets = [9, 0], sizes = [1, 32], strides = [1, 1]} : vector<16x64xf32> to vector<1x32xf32>
    %cst_78 = arith.constant dense<0.000000e+00> : vector<16x96xf32>
    %215 = tpu.matmul %194, %196, %cst_78 {dimension_numbers = #tpu.dot_dimension_numbers<[1], [0], [0], [1], [0, 0, 1, 1], [], []>} : vector<16x32xf32>, vector<32x96xf32>, vector<16x96xf32> -> vector<16x96xf32>
    %216 = vector.extract_strided_slice %215 {offsets = [0, 0], sizes = [16, 32], strides = [1, 1]} : vector<16x96xf32> to vector<16x32xf32>
    %217 = vector.broadcast %205 : vector<1x32xf32> to vector<16x32xf32>
    %218 = arith.addf %216, %217 : vector<16x32xf32>
    %219 = vector.extract_strided_slice %215 {offsets = [0, 32], sizes = [16, 32], strides = [1, 1]} : vector<16x96xf32> to vector<16x32xf32>
    %220 = vector.broadcast %206 : vector<1x32xf32> to vector<16x32xf32>
    %221 = arith.addf %219, %220 : vector<16x32xf32>
    %222 = vector.extract_strided_slice %215 {offsets = [0, 64], sizes = [16, 32], strides = [1, 1]} : vector<16x96xf32> to vector<16x32xf32>
    %223 = vector.broadcast %207 : vector<1x32xf32> to vector<16x32xf32>
    %224 = arith.addf %222, %223 : vector<16x32xf32>
    %225 = vector.extract_strided_slice %218 {offsets = [0, 0], sizes = [16, 8], strides = [1, 1]} : vector<16x32xf32> to vector<16x8xf32>
    %226 = vector.extract_strided_slice %221 {offsets = [0, 0], sizes = [16, 8], strides = [1, 1]} : vector<16x32xf32> to vector<16x8xf32>
    %227 = vector.extract_strided_slice %224 {offsets = [0, 0], sizes = [16, 8], strides = [1, 1]} : vector<16x32xf32> to vector<16x8xf32>
    %228 = tpu.transpose %226, [1, 0] : vector<16x8xf32> -> vector<8x16xf32>
    %cst_79 = arith.constant dense<0.000000e+00> : vector<16x16xf32>
    %229 = tpu.matmul %225, %228, %cst_79 {dimension_numbers = #tpu.dot_dimension_numbers<[1], [0], [0], [1], [0, 0, 1, 1], [], []>} : vector<16x8xf32>, vector<8x16xf32>, vector<16x16xf32> -> vector<16x16xf32>
    %cst_80 = arith.constant 0.353553385 : f32
    %230 = vector.broadcast %cst_80 : f32 to vector<16x16xf32>
    %231 = arith.mulf %229, %230 : vector<16x16xf32>
    %232 = arith.addf %231, %23 : vector<16x16xf32>
    %cst_81 = arith.constant dense<0xFF800000> : vector<16xf32>
    %233 = vector.multi_reduction <maximumf>, %232, %cst_81 [1] : vector<16x16xf32> to vector<16xf32>
    %234 = vector.shape_cast %233 : vector<16xf32> to vector<16x1xf32>
    %235 = vector.broadcast %234 : vector<16x1xf32> to vector<16x16xf32>
    %236 = arith.subf %232, %235 : vector<16x16xf32>
    %237 = math.exp %236 : vector<16x16xf32>
    %cst_82 = arith.constant dense<0.000000e+00> : vector<16xf32>
    %238 = vector.multi_reduction <add>, %237, %cst_82 [1] : vector<16x16xf32> to vector<16xf32>
    %239 = vector.shape_cast %238 : vector<16xf32> to vector<16x1xf32>
    %240 = tpu.reciprocal %239 {approx = true} : vector<16x1xf32> -> vector<16x1xf32>
    %241 = vector.broadcast %240 : vector<16x1xf32> to vector<16x16xf32>
    %242 = arith.mulf %237, %241 : vector<16x16xf32>
    %cst_83 = arith.constant dense<0.000000e+00> : vector<16x8xf32>
    %243 = tpu.matmul %242, %227, %cst_83 {dimension_numbers = #tpu.dot_dimension_numbers<[1], [0], [0], [1], [0, 0, 1, 1], [], []>} : vector<16x16xf32>, vector<16x8xf32>, vector<16x8xf32> -> vector<16x8xf32>
    %244 = vector.extract_strided_slice %218 {offsets = [0, 8], sizes = [16, 8], strides = [1, 1]} : vector<16x32xf32> to vector<16x8xf32>
    %245 = vector.extract_strided_slice %221 {offsets = [0, 8], sizes = [16, 8], strides = [1, 1]} : vector<16x32xf32> to vector<16x8xf32>
    %246 = vector.extract_strided_slice %224 {offsets = [0, 8], sizes = [16, 8], strides = [1, 1]} : vector<16x32xf32> to vector<16x8xf32>
    %247 = tpu.transpose %245, [1, 0] : vector<16x8xf32> -> vector<8x16xf32>
    %cst_84 = arith.constant dense<0.000000e+00> : vector<16x16xf32>
    %248 = tpu.matmul %244, %247, %cst_84 {dimension_numbers = #tpu.dot_dimension_numbers<[1], [0], [0], [1], [0, 0, 1, 1], [], []>} : vector<16x8xf32>, vector<8x16xf32>, vector<16x16xf32> -> vector<16x16xf32>
    %cst_85 = arith.constant 0.353553385 : f32
    %249 = vector.broadcast %cst_85 : f32 to vector<16x16xf32>
    %250 = arith.mulf %248, %249 : vector<16x16xf32>
    %251 = arith.addf %250, %23 : vector<16x16xf32>
    %cst_86 = arith.constant dense<0xFF800000> : vector<16xf32>
    %252 = vector.multi_reduction <maximumf>, %251, %cst_86 [1] : vector<16x16xf32> to vector<16xf32>
    %253 = vector.shape_cast %252 : vector<16xf32> to vector<16x1xf32>
    %254 = vector.broadcast %253 : vector<16x1xf32> to vector<16x16xf32>
    %255 = arith.subf %251, %254 : vector<16x16xf32>
    %256 = math.exp %255 : vector<16x16xf32>
    %cst_87 = arith.constant dense<0.000000e+00> : vector<16xf32>
    %257 = vector.multi_reduction <add>, %256, %cst_87 [1] : vector<16x16xf32> to vector<16xf32>
    %258 = vector.shape_cast %257 : vector<16xf32> to vector<16x1xf32>
    %259 = tpu.reciprocal %258 {approx = true} : vector<16x1xf32> -> vector<16x1xf32>
    %260 = vector.broadcast %259 : vector<16x1xf32> to vector<16x16xf32>
    %261 = arith.mulf %256, %260 : vector<16x16xf32>
    %cst_88 = arith.constant dense<0.000000e+00> : vector<16x8xf32>
    %262 = tpu.matmul %261, %246, %cst_88 {dimension_numbers = #tpu.dot_dimension_numbers<[1], [0], [0], [1], [0, 0, 1, 1], [], []>} : vector<16x16xf32>, vector<16x8xf32>, vector<16x8xf32> -> vector<16x8xf32>
    %263 = vector.extract_strided_slice %218 {offsets = [0, 16], sizes = [16, 8], strides = [1, 1]} : vector<16x32xf32> to vector<16x8xf32>
    %264 = vector.extract_strided_slice %221 {offsets = [0, 16], sizes = [16, 8], strides = [1, 1]} : vector<16x32xf32> to vector<16x8xf32>
    %265 = vector.extract_strided_slice %224 {offsets = [0, 16], sizes = [16, 8], strides = [1, 1]} : vector<16x32xf32> to vector<16x8xf32>
    %266 = tpu.transpose %264, [1, 0] : vector<16x8xf32> -> vector<8x16xf32>
    %cst_89 = arith.constant dense<0.000000e+00> : vector<16x16xf32>
    %267 = tpu.matmul %263, %266, %cst_89 {dimension_numbers = #tpu.dot_dimension_numbers<[1], [0], [0], [1], [0, 0, 1, 1], [], []>} : vector<16x8xf32>, vector<8x16xf32>, vector<16x16xf32> -> vector<16x16xf32>
    %cst_90 = arith.constant 0.353553385 : f32
    %268 = vector.broadcast %cst_90 : f32 to vector<16x16xf32>
    %269 = arith.mulf %267, %268 : vector<16x16xf32>
    %270 = arith.addf %269, %23 : vector<16x16xf32>
    %cst_91 = arith.constant dense<0xFF800000> : vector<16xf32>
    %271 = vector.multi_reduction <maximumf>, %270, %cst_91 [1] : vector<16x16xf32> to vector<16xf32>
    %272 = vector.shape_cast %271 : vector<16xf32> to vector<16x1xf32>
    %273 = vector.broadcast %272 : vector<16x1xf32> to vector<16x16xf32>
    %274 = arith.subf %270, %273 : vector<16x16xf32>
    %275 = math.exp %274 : vector<16x16xf32>
    %cst_92 = arith.constant dense<0.000000e+00> : vector<16xf32>
    %276 = vector.multi_reduction <add>, %275, %cst_92 [1] : vector<16x16xf32> to vector<16xf32>
    %277 = vector.shape_cast %276 : vector<16xf32> to vector<16x1xf32>
    %278 = tpu.reciprocal %277 {approx = true} : vector<16x1xf32> -> vector<16x1xf32>
    %279 = vector.broadcast %278 : vector<16x1xf32> to vector<16x16xf32>
    %280 = arith.mulf %275, %279 : vector<16x16xf32>
    %cst_93 = arith.constant dense<0.000000e+00> : vector<16x8xf32>
    %281 = tpu.matmul %280, %265, %cst_93 {dimension_numbers = #tpu.dot_dimension_numbers<[1], [0], [0], [1], [0, 0, 1, 1], [], []>} : vector<16x16xf32>, vector<16x8xf32>, vector<16x8xf32> -> vector<16x8xf32>
    %282 = vector.extract_strided_slice %218 {offsets = [0, 24], sizes = [16, 8], strides = [1, 1]} : vector<16x32xf32> to vector<16x8xf32>
    %283 = vector.extract_strided_slice %221 {offsets = [0, 24], sizes = [16, 8], strides = [1, 1]} : vector<16x32xf32> to vector<16x8xf32>
    %284 = vector.extract_strided_slice %224 {offsets = [0, 24], sizes = [16, 8], strides = [1, 1]} : vector<16x32xf32> to vector<16x8xf32>
    %285 = tpu.transpose %283, [1, 0] : vector<16x8xf32> -> vector<8x16xf32>
    %cst_94 = arith.constant dense<0.000000e+00> : vector<16x16xf32>
    %286 = tpu.matmul %282, %285, %cst_94 {dimension_numbers = #tpu.dot_dimension_numbers<[1], [0], [0], [1], [0, 0, 1, 1], [], []>} : vector<16x8xf32>, vector<8x16xf32>, vector<16x16xf32> -> vector<16x16xf32>
    %cst_95 = arith.constant 0.353553385 : f32
    %287 = vector.broadcast %cst_95 : f32 to vector<16x16xf32>
    %288 = arith.mulf %286, %287 : vector<16x16xf32>
    %289 = arith.addf %288, %23 : vector<16x16xf32>
    %cst_96 = arith.constant dense<0xFF800000> : vector<16xf32>
    %290 = vector.multi_reduction <maximumf>, %289, %cst_96 [1] : vector<16x16xf32> to vector<16xf32>
    %291 = vector.shape_cast %290 : vector<16xf32> to vector<16x1xf32>
    %292 = vector.broadcast %291 : vector<16x1xf32> to vector<16x16xf32>
    %293 = arith.subf %289, %292 : vector<16x16xf32>
    %294 = math.exp %293 : vector<16x16xf32>
    %cst_97 = arith.constant dense<0.000000e+00> : vector<16xf32>
    %295 = vector.multi_reduction <add>, %294, %cst_97 [1] : vector<16x16xf32> to vector<16xf32>
    %296 = vector.shape_cast %295 : vector<16xf32> to vector<16x1xf32>
    %297 = tpu.reciprocal %296 {approx = true} : vector<16x1xf32> -> vector<16x1xf32>
    %298 = vector.broadcast %297 : vector<16x1xf32> to vector<16x16xf32>
    %299 = arith.mulf %294, %298 : vector<16x16xf32>
    %cst_98 = arith.constant dense<0.000000e+00> : vector<16x8xf32>
    %300 = tpu.matmul %299, %284, %cst_98 {dimension_numbers = #tpu.dot_dimension_numbers<[1], [0], [0], [1], [0, 0, 1, 1], [], []>} : vector<16x16xf32>, vector<16x8xf32>, vector<16x8xf32> -> vector<16x8xf32>
    %301 = tpu.concatenate %243, %262, %281, %300 in 1 : vector<16x8xf32>, vector<16x8xf32>, vector<16x8xf32>, vector<16x8xf32> -> vector<16x32xf32>
    %cst_99 = arith.constant dense<0.000000e+00> : vector<16x32xf32>
    %302 = tpu.matmul %301, %198, %cst_99 {dimension_numbers = #tpu.dot_dimension_numbers<[1], [0], [0], [1], [0, 0, 1, 1], [], []>} : vector<16x32xf32>, vector<32x32xf32>, vector<16x32xf32> -> vector<16x32xf32>
    %303 = vector.broadcast %208 : vector<1x32xf32> to vector<16x32xf32>
    %304 = arith.addf %302, %303 : vector<16x32xf32>
    %305 = arith.addf %304, %194 : vector<16x32xf32>
    %cst_100 = arith.constant dense<0.000000e+00> : vector<16xf32>
    %306 = vector.multi_reduction <add>, %305, %cst_100 [1] : vector<16x32xf32> to vector<16xf32>
    %307 = vector.shape_cast %306 : vector<16xf32> to vector<16x1xf32>
    %cst_101 = arith.constant 3.200000e+01 : f32
    %308 = vector.broadcast %cst_101 : f32 to vector<16x1xf32>
    %309 = arith.divf %307, %308 : vector<16x1xf32>
    %310 = vector.broadcast %309 : vector<16x1xf32> to vector<16x32xf32>
    %311 = arith.subf %305, %310 : vector<16x32xf32>
    %312 = arith.mulf %311, %311 : vector<16x32xf32>
    %cst_102 = arith.constant dense<0.000000e+00> : vector<16xf32>
    %313 = vector.multi_reduction <add>, %312, %cst_102 [1] : vector<16x32xf32> to vector<16xf32>
    %314 = vector.shape_cast %313 : vector<16xf32> to vector<16x1xf32>
    %cst_103 = arith.constant 3.200000e+01 : f32
    %315 = vector.broadcast %cst_103 : f32 to vector<16x1xf32>
    %316 = arith.divf %314, %315 : vector<16x1xf32>
    %cst_104 = arith.constant 9.99999996E-13 : f32
    %317 = vector.broadcast %cst_104 : f32 to vector<16x1xf32>
    %318 = arith.addf %316, %317 : vector<16x1xf32>
    %319 = math.rsqrt %318 : vector<16x1xf32>
    %320 = vector.broadcast %319 : vector<16x1xf32> to vector<16x32xf32>
    %321 = arith.mulf %311, %320 : vector<16x32xf32>
    %322 = vector.broadcast %209 : vector<1x32xf32> to vector<16x32xf32>
    %323 = arith.mulf %321, %322 : vector<16x32xf32>
    %324 = vector.broadcast %210 : vector<1x32xf32> to vector<16x32xf32>
    %325 = arith.addf %323, %324 : vector<16x32xf32>
    %cst_105 = arith.constant dense<0.000000e+00> : vector<16x64xf32>
    %326 = tpu.matmul %325, %200, %cst_105 {dimension_numbers = #tpu.dot_dimension_numbers<[1], [0], [0], [1], [0, 0, 1, 1], [], []>} : vector<16x32xf32>, vector<32x64xf32>, vector<16x64xf32> -> vector<16x64xf32>
    %327 = vector.broadcast %211 : vector<1x64xf32> to vector<16x64xf32>
    %328 = arith.addf %326, %327 : vector<16x64xf32>
    %cst_106 = arith.constant 5.000000e-01 : f32
    %329 = vector.broadcast %cst_106 : f32 to vector<16x64xf32>
    %330 = arith.mulf %329, %328 : vector<16x64xf32>
    %cst_107 = arith.constant 4.471500e-02 : f32
    %331 = vector.broadcast %cst_107 : f32 to vector<16x64xf32>
    %332 = arith.mulf %331, %328 : vector<16x64xf32>
    %333 = arith.mulf %332, %328 : vector<16x64xf32>
    %334 = arith.mulf %333, %328 : vector<16x64xf32>
    %335 = arith.addf %328, %334 : vector<16x64xf32>
    %cst_108 = arith.constant 0.797884583 : f32
    %336 = vector.broadcast %cst_108 : f32 to vector<16x64xf32>
    %337 = arith.mulf %336, %335 : vector<16x64xf32>
    %338 = math.tanh %337 : vector<16x64xf32>
    %cst_109 = arith.constant 1.000000e+00 : f32
    %339 = vector.broadcast %cst_109 : f32 to vector<16x64xf32>
    %340 = arith.addf %339, %338 : vector<16x64xf32>
    %341 = arith.mulf %330, %340 : vector<16x64xf32>
    %cst_110 = arith.constant dense<0.000000e+00> : vector<16x32xf32>
    %342 = tpu.matmul %341, %202, %cst_110 {dimension_numbers = #tpu.dot_dimension_numbers<[1], [0], [0], [1], [0, 0, 1, 1], [], []>} : vector<16x64xf32>, vector<64x32xf32>, vector<16x32xf32> -> vector<16x32xf32>
    %343 = vector.broadcast %212 : vector<1x32xf32> to vector<16x32xf32>
    %344 = arith.addf %342, %343 : vector<16x32xf32>
    %345 = arith.addf %344, %325 : vector<16x32xf32>
    %cst_111 = arith.constant dense<0.000000e+00> : vector<16xf32>
    %346 = vector.multi_reduction <add>, %345, %cst_111 [1] : vector<16x32xf32> to vector<16xf32>
    %347 = vector.shape_cast %346 : vector<16xf32> to vector<16x1xf32>
    %cst_112 = arith.constant 3.200000e+01 : f32
    %348 = vector.broadcast %cst_112 : f32 to vector<16x1xf32>
    %349 = arith.divf %347, %348 : vector<16x1xf32>
    %350 = vector.broadcast %349 : vector<16x1xf32> to vector<16x32xf32>
    %351 = arith.subf %345, %350 : vector<16x32xf32>
    %352 = arith.mulf %351, %351 : vector<16x32xf32>
    %cst_113 = arith.constant dense<0.000000e+00> : vector<16xf32>
    %353 = vector.multi_reduction <add>, %352, %cst_113 [1] : vector<16x32xf32> to vector<16xf32>
    %354 = vector.shape_cast %353 : vector<16xf32> to vector<16x1xf32>
    %cst_114 = arith.constant 3.200000e+01 : f32
    %355 = vector.broadcast %cst_114 : f32 to vector<16x1xf32>
    %356 = arith.divf %354, %355 : vector<16x1xf32>
    %cst_115 = arith.constant 9.99999996E-13 : f32
    %357 = vector.broadcast %cst_115 : f32 to vector<16x1xf32>
    %358 = arith.addf %356, %357 : vector<16x1xf32>
    %359 = math.rsqrt %358 : vector<16x1xf32>
    %360 = vector.broadcast %359 : vector<16x1xf32> to vector<16x32xf32>
    %361 = arith.mulf %351, %360 : vector<16x32xf32>
    %362 = vector.broadcast %213 : vector<1x32xf32> to vector<16x32xf32>
    %363 = arith.mulf %361, %362 : vector<16x32xf32>
    %364 = vector.broadcast %214 : vector<1x32xf32> to vector<16x32xf32>
    %365 = arith.addf %363, %364 : vector<16x32xf32>
    %366 = vector.extract_strided_slice %365 {offsets = [0, 0], sizes = [1, 32], strides = [1, 1]} : vector<16x32xf32> to vector<1x32xf32>
    %367 = vector.extract_strided_slice %365 {offsets = [8, 0], sizes = [1, 32], strides = [1, 1]} : vector<16x32xf32> to vector<1x32xf32>
    %368 = tpu.concatenate %366, %367 in 0 : vector<1x32xf32>, vector<1x32xf32> -> vector<2x32xf32>
    %c0_116 = arith.constant 0 : index
    %c0_117 = arith.constant 0 : index
    %369 = vector.load %arg4[%c0_116, %c0_117] : memref<32x2xf32, #tpu.memory_space<vmem>>, vector<32x2xf32>
    %cst_118 = arith.constant dense<0.000000e+00> : vector<2x2xf32>
    %370 = tpu.matmul %368, %369, %cst_118 {dimension_numbers = #tpu.dot_dimension_numbers<[1], [0], [0], [1], [0, 0, 1, 1], [], []>} : vector<2x32xf32>, vector<32x2xf32>, vector<2x2xf32> -> vector<2x2xf32>
    %c0_119 = arith.constant 0 : index
    %c0_120 = arith.constant 0 : index
    %371 = vector.load %arg5[%c0_119, %c0_120] : memref<1x2xf32, #tpu.memory_space<vmem>>, vector<1x2xf32>
    %372 = vector.broadcast %371 : vector<1x2xf32> to vector<2x2xf32>
    %373 = arith.addf %370, %372 : vector<2x2xf32>
    %c0_121 = arith.constant 0 : index
    %c0_122 = arith.constant 0 : index
    %374 = vector.load %arg11[%c0_121, %c0_122] : memref<2x2xf32, #tpu.memory_space<vmem>>, vector<2x2xf32>
    tpu.vector_store %arg11[%c0_121, %c0_122], %373 {strides = array<i32>} : memref<2x2xf32, #tpu.memory_space<vmem>>, vector<2x2xf32>,
    %cst_123 = arith.constant dense<0xFF800000> : vector<2xf32>
    %375 = vector.multi_reduction <maximumf>, %373, %cst_123 [1] : vector<2x2xf32> to vector<2xf32>
    %376 = vector.shape_cast %375 : vector<2xf32> to vector<2x1xf32>
    %377 = vector.broadcast %376 : vector<2x1xf32> to vector<2x2xf32>
    %378 = arith.subf %373, %377 : vector<2x2xf32>
    %379 = math.exp %378 : vector<2x2xf32>
    %cst_124 = arith.constant dense<0.000000e+00> : vector<2xf32>
    %380 = vector.multi_reduction <add>, %379, %cst_124 [1] : vector<2x2xf32> to vector<2xf32>
    %381 = vector.shape_cast %380 : vector<2xf32> to vector<2x1xf32>
    %382 = math.log %381 : vector<2x1xf32>
    %383 = arith.addf %376, %382 : vector<2x1xf32>
    %c0_125 = arith.constant 0 : index
    %c0_126 = arith.constant 0 : index
    %384 = vector.load %arg2[%c0_125, %c0_126] : memref<2x2xf32, #tpu.memory_space<vmem>>, vector<2x2xf32>
    %385 = arith.mulf %384, %373 : vector<2x2xf32>
    %cst_127 = arith.constant dense<0.000000e+00> : vector<2xf32>
    %386 = vector.multi_reduction <add>, %385, %cst_127 [1] : vector<2x2xf32> to vector<2xf32>
    %387 = vector.shape_cast %386 : vector<2xf32> to vector<2x1xf32>
    %388 = arith.subf %383, %387 : vector<2x1xf32>
    %389 = vector.shape_cast %388 : vector<2x1xf32> to vector<1x2x1xf32>
    %cst_128 = arith.constant dense<0.000000e+00> : vector<1xf32>
    %390 = vector.multi_reduction <add>, %389, %cst_128 [1, 2] : vector<1x2x1xf32> to vector<1xf32>
    %391 = vector.shape_cast %390 : vector<1xf32> to vector<1x1x1xf32>
    %392 = vector.extract %391[0, 0, 0] : f32 from vector<1x1x1xf32>
    %cst_129 = arith.constant 2.000000e+00 : f32
    %393 = arith.divf %392, %cst_129 : f32
    %394 = vector.broadcast %393 : f32 to vector<1x1xf32>
    %c0_130 = arith.constant 0 : index
    %c0_131 = arith.constant 0 : index
    %395 = vector.load %arg12[%c0_130, %c0_131] : memref<1x1xf32, #tpu.memory_space<vmem>>, vector<1x1xf32>
    tpu.vector_store %arg12[%c0_130, %c0_131], %394 {strides = array<i32>} : memref<1x1xf32, #tpu.memory_space<vmem>>, vector<1x1xf32>,
    return
  }
}

</mosaic_0001>

<llo_original>
// kernel: tpu_custom_call.1
$region0: #{tpu_custom_call.1}
  #allocation0 [shape = 'u32[]', space=smem, size = 0x4, offset = 0x4, fixed_abs, tag = 'smem constant byte address 0x4 - core index']
  #allocation1 [shape = 'u32[72,128]{1,0:T(1,128)}', space=vmem, size = 0x9000, scoped, tag = 'internal scratch']
  %s0 = inlined_call_operand.hbm [shape: f32[16,32], index: 0, kind: input, shape index: {}]
  %s1 = inlined_call_operand.hbm [shape: f32[16,16], index: 1, kind: input, shape index: {}]
  %s2 = inlined_call_operand.vmem [shape: f32[2,2], index: 2, kind: input, shape index: {}]
  %s3 = inlined_call_operand.hbm [shape: f32[2,32], index: 3, kind: input, shape index: {}]
  %s4 = inlined_call_operand.vmem [shape: f32[32,2], index: 4, kind: input, shape index: {}]
  %s5 = inlined_call_operand.vmem [shape: f32[1,2], index: 5, kind: input, shape index: {}]
  %s6 = inlined_call_operand.vmem [shape: f32[2,32,96], index: 6, kind: input, shape index: {}]
  %s7 = inlined_call_operand.vmem [shape: f32[2,32,32], index: 7, kind: input, shape index: {}]
  %s8 = inlined_call_operand.vmem [shape: f32[2,32,64], index: 8, kind: input, shape index: {}]
  %s9 = inlined_call_operand.vmem [shape: f32[2,64,32], index: 9, kind: input, shape index: {}]
  %s10 = inlined_call_operand.vmem [shape: f32[2,16,64], index: 10, kind: input, shape index: {}]
  %s11 = inlined_call_operand.hbm [shape: f32[2,2], index: 11, kind: output, shape index: {0}]
  %s12 = inlined_call_operand.hbm [shape: f32[1,1], index: 12, kind: output, shape index: {1}]
  %13 = xla_tuple %s11, %s12
  %s14 = sld [smem:[#allocation0]]
  $region74: #{tpu_custom_call.1} parent=0
    _
  %s16 = ssub.s32 1, %s14
  %s17 = scalar_select 0, %s16, %s14
  $region1: #{tpu_custom_call.1} parent=0
    #allocation2 [shape = 'u8[8192]{0}', space=vmem, size = 0x2000, scoped, tag = 'input window, operand 0, single buffered']
    #allocation3 [shape = 's32[1]{0}', space=sflag, size = 0x4, scoped, tag = 'scoped memory for tpu_custom_call.1']
    #allocation4 [shape = 's32[1]{0}', space=sflag, size = 0x4, scoped, tag = 'scoped memory for tpu_custom_call.1']
    #allocation5 [shape = 'u8[8192]{0}', space=vmem, size = 0x2000, scoped, tag = 'input window, operand 1, single buffered']
    #allocation6 [shape = 's32[1]{0}', space=sflag, size = 0x4, scoped, tag = 'scoped memory for tpu_custom_call.1']
    #allocation7 [shape = 'u8[1024]{0}', space=vmem, size = 0x400, scoped, tag = 'input window, operand 3, single buffered']
    #allocation8 [shape = 'u8[1024]{0}', space=vmem, size = 0x400, scoped, tag = 'output window, operand 0, single buffered']
    #allocation9 [shape = 'u8[512]{0}', space=vmem, size = 0x400, scoped, tag = 'output window, operand 1, single buffered']
    #allocation10 [shape = 's32[1]{0}', space=sflag, size = 0x4, scoped, tag = 'scoped memory for tpu_custom_call.1']
    %18 = vsyncpa [#allocation3], 0
    %19 = vsyncpa [#allocation6], 0
    %20 = vsyncpa [#allocation4], 0
    %21 = vsyncpa [#allocation10], 0
    // Predicated region
    $region2: #{tpu_custom_call.1} parent=1 // pred_check
      _
    $region3: #{tpu_custom_call.1} parent=1 // pred_check_branch
      %23 = sbr.rel (0) target = $region5
    $region4: #{tpu_custom_call.1} parent=1 // pred_region
      %25 = vsyncadd [#allocation3], 0
      %s26 = sshll.u32 %s0, 4
      %s27 = int_to_ptr.hbm [resolvable:$true] %s26
      %s28 = sshll.u32 [#allocation2], 4
      %s29 = int_to_ptr.vmem [resolvable:$true] %s28
      %34 = dma.hbm_to_vmem [thread:$0]  %s27, 256, %s29, [#allocation3], 128, 128, 8
    $region5: #{tpu_custom_call.1} parent=1 // pred_fallthru
      _
    // Predicated region
    $region6: #{tpu_custom_call.1} parent=1 // pred_check
      _
    $region7: #{tpu_custom_call.1} parent=1 // pred_check_branch
      %36 = sbr.rel (0) target = $region9
    $region8: #{tpu_custom_call.1} parent=1 // pred_region
      %38 = vsyncadd [#allocation6], 0
      %s39 = sshll.u32 %s1, 4
      %s40 = int_to_ptr.hbm [resolvable:$true] %s39
      %s41 = sshll.u32 [#allocation5], 4
      %s42 = int_to_ptr.vmem [resolvable:$true] %s41
      %47 = dma.hbm_to_vmem [thread:$0]  %s40, 256, %s42, [#allocation6], 128, 128, 8
    $region9: #{tpu_custom_call.1} parent=1 // pred_fallthru
      _
    // Predicated region
    $region10: #{tpu_custom_call.1} parent=1 // pred_check
      _
    $region11: #{tpu_custom_call.1} parent=1 // pred_check_branch
      %49 = sbr.rel (0) target = $region13
    $region12: #{tpu_custom_call.1} parent=1 // pred_region
      _
    $region13: #{tpu_custom_call.1} parent=1 // pred_fallthru
      _
    // Predicated region
    $region14: #{tpu_custom_call.1} parent=1 // pred_check
      _
    $region15: #{tpu_custom_call.1} parent=1 // pred_check_branch
      %51 = sbr.rel (0) target = $region17
    $region16: #{tpu_custom_call.1} parent=1 // pred_region
      %53 = vsyncadd [#allocation6], 0
      %s55 = sshll.u32 %s3, 4
      %s56 = int_to_ptr.hbm [resolvable:$true] %s55
      %s57 = sshll.u32 [#allocation7], 4
      %s58 = int_to_ptr.vmem [resolvable:$true] %s57
      %60 = dma.hbm_to_vmem [thread:$0]  %s56, 32, %s58, [#allocation6]
    $region17: #{tpu_custom_call.1} parent=1 // pred_fallthru
      _
    // Predicated region
    $region18: #{tpu_custom_call.1} parent=1 // pred_check
      _
    $region19: #{tpu_custom_call.1} parent=1 // pred_check_branch
      %62 = sbr.rel (0) target = $region21
    $region20: #{tpu_custom_call.1} parent=1 // pred_region
      _
    $region21: #{tpu_custom_call.1} parent=1 // pred_fallthru
      _
    // Predicated region
    $region22: #{tpu_custom_call.1} parent=1 // pred_check
      _
    $region23: #{tpu_custom_call.1} parent=1 // pred_check_branch
      %64 = sbr.rel (0) target = $region25
    $region24: #{tpu_custom_call.1} parent=1 // pred_region
      _
    $region25: #{tpu_custom_call.1} parent=1 // pred_fallthru
      _
    // Predicated region
    $region26: #{tpu_custom_call.1} parent=1 // pred_check
      _
    $region27: #{tpu_custom_call.1} parent=1 // pred_check_branch
      %66 = sbr.rel (0) target = $region29
    $region28: #{tpu_custom_call.1} parent=1 // pred_region
      _
    $region29: #{tpu_custom_call.1} parent=1 // pred_fallthru
      _
    // Predicated region
    $region30: #{tpu_custom_call.1} parent=1 // pred_check
      _
    $region31: #{tpu_custom_call.1} parent=1 // pred_check_branch
      %68 = sbr.rel (0) target = $region33
    $region32: #{tpu_custom_call.1} parent=1 // pred_region
      _
    $region33: #{tpu_custom_call.1} parent=1 // pred_fallthru
      _
    // Predicated region
    $region34: #{tpu_custom_call.1} parent=1 // pred_check
      _
    $region35: #{tpu_custom_call.1} parent=1 // pred_check_branch
      %70 = sbr.rel (0) target = $region37
    $region36: #{tpu_custom_call.1} parent=1 // pred_region
      _
    $region37: #{tpu_custom_call.1} parent=1 // pred_fallthru
      _
    // Predicated region
    $region38: #{tpu_custom_call.1} parent=1 // pred_check
      _
    $region39: #{tpu_custom_call.1} parent=1 // pred_check_branch
      %72 = sbr.rel (0) target = $region41
    $region40: #{tpu_custom_call.1} parent=1 // pred_region
      _
    $region41: #{tpu_custom_call.1} parent=1 // pred_fallthru
      _
    // Predicated region
    $region42: #{tpu_custom_call.1} parent=1 // pred_check
      _
    $region43: #{tpu_custom_call.1} parent=1 // pred_check_branch
      %74 = sbr.rel (0) target = $region45
    $region44: #{tpu_custom_call.1} parent=1 // pred_region
      _
    $region45: #{tpu_custom_call.1} parent=1 // pred_fallthru
      _
    // Predicated region
    $region46: #{tpu_custom_call.1} parent=1 // pred_check
      _
    $region47: #{tpu_custom_call.1} parent=1 // pred_check_branch
      %76 = sbr.rel (0) target = $region49
    $region48: #{tpu_custom_call.1} parent=1 // pred_region
      %78 = dma.done [#allocation3], 256
    $region49: #{tpu_custom_call.1} parent=1 // pred_fallthru
      _
    // Predicated region
    $region50: #{tpu_custom_call.1} parent=1 // pred_check
      _
    $region51: #{tpu_custom_call.1} parent=1 // pred_check_branch
      %80 = sbr.rel (0) target = $region53
    $region52: #{tpu_custom_call.1} parent=1 // pred_region
      %82 = dma.done [#allocation6], 256
    $region53: #{tpu_custom_call.1} parent=1 // pred_fallthru
      _
    // Predicated region
    $region54: #{tpu_custom_call.1} parent=1 // pred_check
      _
    $region55: #{tpu_custom_call.1} parent=1 // pred_check_branch
      %84 = sbr.rel (0) target = $region57
    $region56: #{tpu_custom_call.1} parent=1 // pred_region
      %86 = dma.done [#allocation6], 32
    $region57: #{tpu_custom_call.1} parent=1 // pred_fallthru
      _
    %v87 = vld [vmem:[#allocation2] sm:$0xff]
    %v88 = vld [vmem:[#allocation2 + $0x8] sm:$0xff]
    %v89 = vld [vmem:[#allocation7] sm:$0x1]
    %v90 = vld [vmem:[#allocation7 + $0x1] sm:$0x1]
    %vm91 = vcmask 261120
    %v92 = vsel %vm91, %v87, 0.0
    %93 = vadd.xlane.f32.xlu0 %v92
    %v94 = vpop.xlane.xlu0 %93
    %v95 = vsel %vm91, %v88, 0.0
    %96 = vadd.xlane.f32.xlu0 %v95
    %v97 = vpop.xlane.xlu0 %96
    %v98 = vrcp.pop 32.0
    %v99 = vmul.f32 32.0, %v98
    %v100 = vsub.f32 1.0, %v99
    %v101 = vmul.f32 %v98, %v100
    %v102 = vadd.f32 %v98, %v101
    %vm103 = vweird.f32 %v98
    %v104 = vsel %vm103, %v98, %v102
    %v105 = vmul.f32 %v94, %v104
    %v106 = vmul.f32 %v97, %v104
    %v107 = vsub.f32 %v87, %v105
    %v108 = vsub.f32 %v88, %v106
    %v109 = vmul.f32 %v107, %v107
    %v110 = vmul.f32 %v108, %v108
    %v111 = vsel %vm91, %v109, 0.0
    %112 = vadd.xlane.f32.xlu0 %v111
    %v113 = vpop.xlane.xlu0 %112
    %v114 = vsel %vm91, %v110, 0.0
    %115 = vadd.xlane.f32.xlu0 %v114
    %v116 = vpop.xlane.xlu0 %115
    %v117 = vmul.f32 %v113, %v104
    %v118 = vmul.f32 %v116, %v104
    %v119 = vadd.f32 %v117, 1e-12
    %v120 = vadd.f32 %v118, 1e-12
    %v121 = vrsqrt.pop %v119
    %v122 = vmul.f32 %v121, %v119
    %v123 = vmul.f32 %v122, %v121
    %v124 = vmul.f32 0.5, %v123
    %v125 = vsub.f32 1.5, %v124
    %v126 = vmul.f32 %v121, %v125
    %vm127 = vweird.f32 %v119
    %vm128 = vweird.f32 %v121
    %vm129 = vmor %vm127, %vm128
    %v130 = vsel %vm129, %v121, %v126
    %v131 = vrsqrt.pop %v120
    %v132 = vmul.f32 %v131, %v120
    %v133 = vmul.f32 %v132, %v131
    %v134 = vmul.f32 0.5, %v133
    %v135 = vsub.f32 1.5, %v134
    %v136 = vmul.f32 %v131, %v135
    %vm137 = vweird.f32 %v120
    %vm138 = vweird.f32 %v131
    %vm139 = vmor %vm137, %vm138
    %v140 = vsel %vm139, %v131, %v136
    %v141 = vmul.f32 %v107, %v130
    %v142 = vmul.f32 %v108, %v140
    %v143 = vperm.slane %v89, 0
    %v144 = vmul.f32 %v141, %v143
    %v145 = vmul.f32 %v142, %v143
    %v146 = vperm.slane %v90, 0
    %v147 = vadd.f32 %v144, %v146
    %v148 = vadd.f32 %v145, %v146
    %v149 = vld [vmem:[#allocation5] sm:$0xff]
    %v150 = vld [vmem:[#allocation5 + $0x8] sm:$0xff]
    %v151 = vld [vmem:[%s6] sm:$0xff]
    %v152 = vld [vmem:[%s6 + $0x8] sm:$0xff]
    %v153 = vld [vmem:[%s6 + $0x10] sm:$0xff]
    %v154 = vld [vmem:[%s6 + $0x18] sm:$0xff]
    %v155 = vld [vmem:[%s7] sm:$0xff]
    %v156 = vld [vmem:[%s7 + $0x8] sm:$0xff]
    %v157 = vld [vmem:[%s7 + $0x10] sm:$0xff]
    %v158 = vld [vmem:[%s7 + $0x18] sm:$0xff]
    %v159 = vld [vmem:[%s8] sm:$0xff]
    %v160 = vld [vmem:[%s8 + $0x8] sm:$0xff]
    %v161 = vld [vmem:[%s8 + $0x10] sm:$0xff]
    %v162 = vld [vmem:[%s8 + $0x18] sm:$0xff]
    %v163 = vld [vmem:[%s9] sm:$0xff]
    %v164 = vld [vmem:[%s9 + $0x8] sm:$0xff]
    %v165 = vld [vmem:[%s9 + $0x10] sm:$0xff]
    %v166 = vld [vmem:[%s9 + $0x18] sm:$0xff]
    %v167 = vld [vmem:[%s9 + $0x20] sm:$0xff]
    %v168 = vld [vmem:[%s9 + $0x28] sm:$0xff]
    %v169 = vld [vmem:[%s9 + $0x30] sm:$0xff]
    %v170 = vld [vmem:[%s9 + $0x38] sm:$0xff]
    %v171 = vld [vmem:[%s10] sm:$0xff]
    %v172 = vld [vmem:[%s10 + $0x8] sm:$0xff]
    %v174 = vsel %vm91, %v147, 0
    %v177 = vsel %vm91, %v148, 0
    %179 = vmatpush.msra.mxu0 0.0
    %180 = vmatpush.msra.mxu0 0.0
    %181 = vmatpush.msra.mxu0 0.0
    %182 = vmatpush.msra.mxu0 0.0
    %183 = vmatpush.msra.mxu0 0.0
    %184 = vmatpush.msra.mxu0 0.0
    %185 = vmatpush.msra.mxu0 0.0
    %186 = vmatpush.msra.mxu0 0.0
    %187 = vmatpush.msra.mxu0 0.0
    %188 = vmatpush.msra.mxu0 0.0
    %189 = vmatpush.msra.mxu0 0.0
    %190 = vmatpush.msra.mxu0 0.0
    %191 = vmatpush.msra.mxu0 %v154
    %192 = vmatpush.msra.mxu0 %v153
    %193 = vmatpush.msra.mxu0 %v152
    %194 = vmatpush.msra.mxu0 %v151
    %195 = vmatmul.f32.gmra.mxu0 %v174
    %v196 = vpop.f32.mrf.mxu0
    %v197 = vadd.f32 0.0, %v196
    %198 = vmatmul.f32.gmra.mxu0 %v177
    %v199 = vpop.f32.mrf.mxu0
    %v200 = vadd.f32 0.0, %v199
    %201 = vdwg.mxu0
    %v202 = vperm.slane %v171, 0
    %v203 = vadd.f32 %v197, %v202
    %v204 = vadd.f32 %v200, %v202
    %v205 = vperm.slane %v171, 1
    %207 = vrot.lane.b32.xlu0 %v205, 32
    %v208 = vpop.permute.xlu0 %207
    %v210 = vadd.f32 %v197, %v208
    %v211 = vadd.f32 %v200, %v208
    %v212 = vperm.slane %v171, 2
    %214 = vrot.lane.b32.xlu0 %v212, 64
    %v215 = vpop.permute.xlu0 %214
    %v217 = vadd.f32 %v197, %v215
    %v218 = vadd.f32 %v200, %v215
    %221 = vrot.lane.b32.xlu0 %v210, 96
    %v222 = vpop.permute.xlu0 %221
    %223 = vrot.lane.b32.xlu0 %v211, 96
    %v224 = vpop.permute.xlu0 %223
    %vm225 = vcmask 64512
    %v227 = vsel %vm225, %v203, 0
    %v230 = vsel %vm225, %v204, 0
    %v232 = vsel %vm225, %v222, 0
    %v234 = vsel %vm225, %v224, 0
    %236 = vmatpush.xpose.msra.mxu0 0.0
    %237 = vmatpush.xpose.msra.mxu0 0.0
    %238 = vmatpush.xpose.msra.mxu0 0.0
    %239 = vmatpush.xpose.msra.mxu0 0.0
    %240 = vmatpush.xpose.msra.mxu0 0.0
    %241 = vmatpush.xpose.msra.mxu0 0.0
    %242 = vmatpush.xpose.msra.mxu0 0.0
    %243 = vmatpush.xpose.msra.mxu0 0.0
    %244 = vmatpush.xpose.msra.mxu0 0.0
    %245 = vmatpush.xpose.msra.mxu0 0.0
    %246 = vmatpush.xpose.msra.mxu0 0.0
    %247 = vmatpush.xpose.msra.mxu0 0.0
    %248 = vmatpush.xpose.msra.mxu0 0.0
    %249 = vmatpush.xpose.msra.mxu0 0.0
    %250 = vmatpush.xpose.msra.mxu0 %v234
    %251 = vmatpush.xpose.msra.mxu0 %v232
    %252 = vmatmul.f32.gmra.mxu0 %v227
    %v253 = vpop.f32.mrf.mxu0
    %v254 = vadd.f32 0.0, %v253
    %255 = vmatmul.f32.gmra.mxu0 %v230
    %v256 = vpop.f32.mrf.mxu0
    %v257 = vadd.f32 0.0, %v256
    %258 = vdwg.mxu0
    %v259 = vmul.f32 %v254, 0.35355338
    %v260 = vmul.f32 %v257, 0.35355338
    %v261 = vadd.f32 %v259, %v149
    %v262 = vadd.f32 %v260, %v150
    %vm263 = vcmask 130048
    %v264 = vsel %vm263, %v261, -inf
    %265 = vmax.xlane.f32.xlu0 %v264
    %v266 = vpop.xlane.xlu0 %265
    %v267 = vsel %vm263, %v262, -inf
    %268 = vmax.xlane.f32.xlu0 %v267
    %v269 = vpop.xlane.xlu0 %268
    %v270 = vsub.f32 %v261, %v266
    %v271 = vsub.f32 %v262, %v269
    %v272 = vmul.f32 %v270, 1.442695
    %v273 = vpow.pop %v272
    %v274 = vmul.f32 %v271, 1.442695
    %v275 = vpow.pop %v274
    %v276 = vsel %vm263, %v273, 0.0
    %277 = vadd.xlane.f32.xlu0 %v276
    %v278 = vpop.xlane.xlu0 %277
    %v279 = vsel %vm263, %v275, 0.0
    %280 = vadd.xlane.f32.xlu0 %v279
    %v281 = vpop.xlane.xlu0 %280
    %v282 = vrcp.pop %v278
    %v283 = vrcp.pop %v281
    %v284 = vmul.f32 %v273, %v282
    %v285 = vmul.f32 %v275, %v283
    %288 = vrot.lane.b32.xlu0 %v217, 64
    %v289 = vpop.permute.xlu0 %288
    %290 = vrot.lane.b32.xlu0 %v218, 64
    %v291 = vpop.permute.xlu0 %290
    %v295 = vsel %vm263, %v284, 0
    %v298 = vsel %vm263, %v285, 0
    %300 = vmatpush.msra.mxu0 0.0
    %301 = vmatpush.msra.mxu0 0.0
    %302 = vmatpush.msra.mxu0 0.0
    %303 = vmatpush.msra.mxu0 0.0
    %304 = vmatpush.msra.mxu0 0.0
    %305 = vmatpush.msra.mxu0 0.0
    %306 = vmatpush.msra.mxu0 0.0
    %307 = vmatpush.msra.mxu0 0.0
    %308 = vmatpush.msra.mxu0 0.0
    %309 = vmatpush.msra.mxu0 0.0
    %310 = vmatpush.msra.mxu0 0.0
    %311 = vmatpush.msra.mxu0 0.0
    %312 = vmatpush.msra.mxu0 0.0
    %313 = vmatpush.msra.mxu0 0.0
    %314 = vmatpush.msra.mxu0 %v291
    %315 = vmatpush.msra.mxu0 %v289
    %316 = vmatmul.f32.gmra.mxu0 %v295
    %v317 = vpop.f32.mrf.mxu0
    %v318 = vadd.f32 0.0, %v317
    %319 = vmatmul.f32.gmra.mxu0 %v298
    %v320 = vpop.f32.mrf.mxu0
    %v321 = vadd.f32 0.0, %v320
    %322 = vdwg.mxu0
    %323 = vrot.lane.b32.xlu0 %v203, 120
    %v324 = vpop.permute.xlu0 %323
    %325 = vrot.lane.b32.xlu0 %v204, 120
    %v326 = vpop.permute.xlu0 %325
    %327 = vrot.lane.b32.xlu0 %v210, 88
    %v328 = vpop.permute.xlu0 %327
    %329 = vrot.lane.b32.xlu0 %v211, 88
    %v330 = vpop.permute.xlu0 %329
    %v331 = vsel %vm225, %v324, 0
    %v333 = vsel %vm225, %v326, 0
    %v335 = vsel %vm225, %v328, 0
    %v337 = vsel %vm225, %v330, 0
    %339 = vmatpush.xpose.msra.mxu0 0.0
    %340 = vmatpush.xpose.msra.mxu0 0.0
    %341 = vmatpush.xpose.msra.mxu0 0.0
    %342 = vmatpush.xpose.msra.mxu0 0.0
    %343 = vmatpush.xpose.msra.mxu0 0.0
    %344 = vmatpush.xpose.msra.mxu0 0.0
    %345 = vmatpush.xpose.msra.mxu0 0.0
    %346 = vmatpush.xpose.msra.mxu0 0.0
    %347 = vmatpush.xpose.msra.mxu0 0.0
    %348 = vmatpush.xpose.msra.mxu0 0.0
    %349 = vmatpush.xpose.msra.mxu0 0.0
    %350 = vmatpush.xpose.msra.mxu0 0.0
    %351 = vmatpush.xpose.msra.mxu0 0.0
    %352 = vmatpush.xpose.msra.mxu0 0.0
    %353 = vmatpush.xpose.msra.mxu0 %v337
    %354 = vmatpush.xpose.msra.mxu0 %v335
    %355 = vmatmul.f32.gmra.mxu0 %v331
    %v356 = vpop.f32.mrf.mxu0
    %v357 = vadd.f32 0.0, %v356
    %358 = vmatmul.f32.gmra.mxu0 %v333
    %v359 = vpop.f32.mrf.mxu0
    %v360 = vadd.f32 0.0, %v359
    %361 = vdwg.mxu0
    %v362 = vmul.f32 %v357, 0.35355338
    %v363 = vmul.f32 %v360, 0.35355338
    %v364 = vadd.f32 %v362, %v149
    %v365 = vadd.f32 %v363, %v150
    %v366 = vsel %vm263, %v364, -inf
    %367 = vmax.xlane.f32.xlu0 %v366
    %v368 = vpop.xlane.xlu0 %367
    %v369 = vsel %vm263, %v365, -inf
    %370 = vmax.xlane.f32.xlu0 %v369
    %v371 = vpop.xlane.xlu0 %370
    %v372 = vsub.f32 %v364, %v368
    %v373 = vsub.f32 %v365, %v371
    %v374 = vmul.f32 %v372, 1.442695
    %v375 = vpow.pop %v374
    %v376 = vmul.f32 %v373, 1.442695
    %v377 = vpow.pop %v376
    %v378 = vsel %vm263, %v375, 0.0
    %379 = vadd.xlane.f32.xlu0 %v378
    %v380 = vpop.xlane.xlu0 %379
    %v381 = vsel %vm263, %v377, 0.0
    %382 = vadd.xlane.f32.xlu0 %v381
    %v383 = vpop.xlane.xlu0 %382
    %v384 = vrcp.pop %v380
    %v385 = vrcp.pop %v383
    %v386 = vmul.f32 %v375, %v384
    %v387 = vmul.f32 %v377, %v385
    %388 = vrot.lane.b32.xlu0 %v217, 56
    %v389 = vpop.permute.xlu0 %388
    %390 = vrot.lane.b32.xlu0 %v218, 56
    %v391 = vpop.permute.xlu0 %390
    %v395 = vsel %vm263, %v386, 0
    %v398 = vsel %vm263, %v387, 0
    %400 = vmatpush.msra.mxu0 0.0
    %401 = vmatpush.msra.mxu0 0.0
    %402 = vmatpush.msra.mxu0 0.0
    %403 = vmatpush.msra.mxu0 0.0
    %404 = vmatpush.msra.mxu0 0.0
    %405 = vmatpush.msra.mxu0 0.0
    %406 = vmatpush.msra.mxu0 0.0
    %407 = vmatpush.msra.mxu0 0.0
    %408 = vmatpush.msra.mxu0 0.0
    %409 = vmatpush.msra.mxu0 0.0
    %410 = vmatpush.msra.mxu0 0.0
    %411 = vmatpush.msra.mxu0 0.0
    %412 = vmatpush.msra.mxu0 0.0
    %413 = vmatpush.msra.mxu0 0.0
    %414 = vmatpush.msra.mxu0 %v391
    %415 = vmatpush.msra.mxu0 %v389
    %416 = vmatmul.f32.gmra.mxu0 %v395
    %v417 = vpop.f32.mrf.mxu0
    %v418 = vadd.f32 0.0, %v417
    %419 = vmatmul.f32.gmra.mxu0 %v398
    %v420 = vpop.f32.mrf.mxu0
    %v421 = vadd.f32 0.0, %v420
    %422 = vdwg.mxu0
    %423 = vrot.lane.b32.xlu0 %v203, 112
    %v424 = vpop.permute.xlu0 %423
    %425 = vrot.lane.b32.xlu0 %v204, 112
    %v426 = vpop.permute.xlu0 %425
    %427 = vrot.lane.b32.xlu0 %v210, 80
    %v428 = vpop.permute.xlu0 %427
    %429 = vrot.lane.b32.xlu0 %v211, 80
    %v430 = vpop.permute.xlu0 %429
    %v431 = vsel %vm225, %v424, 0
    %v433 = vsel %vm225, %v426, 0
    %v435 = vsel %vm225, %v428, 0
    %v437 = vsel %vm225, %v430, 0
    %439 = vmatpush.xpose.msra.mxu0 0.0
    %440 = vmatpush.xpose.msra.mxu0 0.0
    %441 = vmatpush.xpose.msra.mxu0 0.0
    %442 = vmatpush.xpose.msra.mxu0 0.0
    %443 = vmatpush.xpose.msra.mxu0 0.0
    %444 = vmatpush.xpose.msra.mxu0 0.0
    %445 = vmatpush.xpose.msra.mxu0 0.0
    %446 = vmatpush.xpose.msra.mxu0 0.0
    %447 = vmatpush.xpose.msra.mxu0 0.0
    %448 = vmatpush.xpose.msra.mxu0 0.0
    %449 = vmatpush.xpose.msra.mxu0 0.0
    %450 = vmatpush.xpose.msra.mxu0 0.0
    %451 = vmatpush.xpose.msra.mxu0 0.0
    %452 = vmatpush.xpose.msra.mxu0 0.0
    %453 = vmatpush.xpose.msra.mxu0 %v437
    %454 = vmatpush.xpose.msra.mxu0 %v435
    %455 = vmatmul.f32.gmra.mxu0 %v431
    %v456 = vpop.f32.mrf.mxu0
    %v457 = vadd.f32 0.0, %v456
    %458 = vmatmul.f32.gmra.mxu0 %v433
    %v459 = vpop.f32.mrf.mxu0
    %v460 = vadd.f32 0.0, %v459
    %461 = vdwg.mxu0
    %v462 = vmul.f32 %v457, 0.35355338
    %v463 = vmul.f32 %v460, 0.35355338
    %v464 = vadd.f32 %v462, %v149
    %v465 = vadd.f32 %v463, %v150
    %v466 = vsel %vm263, %v464, -inf
    %467 = vmax.xlane.f32.xlu0 %v466
    %v468 = vpop.xlane.xlu0 %467
    %v469 = vsel %vm263, %v465, -inf
    %470 = vmax.xlane.f32.xlu0 %v469
    %v471 = vpop.xlane.xlu0 %470
    %v472 = vsub.f32 %v464, %v468
    %v473 = vsub.f32 %v465, %v471
    %v474 = vmul.f32 %v472, 1.442695
    %v475 = vpow.pop %v474
    %v476 = vmul.f32 %v473, 1.442695
    %v477 = vpow.pop %v476
    %v478 = vsel %vm263, %v475, 0.0
    %479 = vadd.xlane.f32.xlu0 %v478
    %v480 = vpop.xlane.xlu0 %479
    %v481 = vsel %vm263, %v477, 0.0
    %482 = vadd.xlane.f32.xlu0 %v481
    %v483 = vpop.xlane.xlu0 %482
    %v484 = vrcp.pop %v480
    %v485 = vrcp.pop %v483
    %v486 = vmul.f32 %v475, %v484
    %v487 = vmul.f32 %v477, %v485
    %488 = vrot.lane.b32.xlu0 %v217, 48
    %v489 = vpop.permute.xlu0 %488
    %490 = vrot.lane.b32.xlu0 %v218, 48
    %v491 = vpop.permute.xlu0 %490
    %v495 = vsel %vm263, %v486, 0
    %v498 = vsel %vm263, %v487, 0
    %500 = vmatpush.msra.mxu0 0.0
    %501 = vmatpush.msra.mxu0 0.0
    %502 = vmatpush.msra.mxu0 0.0
    %503 = vmatpush.msra.mxu0 0.0
    %504 = vmatpush.msra.mxu0 0.0
    %505 = vmatpush.msra.mxu0 0.0
    %506 = vmatpush.msra.mxu0 0.0
    %507 = vmatpush.msra.mxu0 0.0
    %508 = vmatpush.msra.mxu0 0.0
    %509 = vmatpush.msra.mxu0 0.0
    %510 = vmatpush.msra.mxu0 0.0
    %511 = vmatpush.msra.mxu0 0.0
    %512 = vmatpush.msra.mxu0 0.0
    %513 = vmatpush.msra.mxu0 0.0
    %514 = vmatpush.msra.mxu0 %v491
    %515 = vmatpush.msra.mxu0 %v489
    %516 = vmatmul.f32.gmra.mxu0 %v495
    %v517 = vpop.f32.mrf.mxu0
    %v518 = vadd.f32 0.0, %v517
    %519 = vmatmul.f32.gmra.mxu0 %v498
    %v520 = vpop.f32.mrf.mxu0
    %v521 = vadd.f32 0.0, %v520
    %522 = vdwg.mxu0
    %523 = vrot.lane.b32.xlu0 %v203, 104
    %v524 = vpop.permute.xlu0 %523
    %525 = vrot.lane.b32.xlu0 %v204, 104
    %v526 = vpop.permute.xlu0 %525
    %527 = vrot.lane.b32.xlu0 %v210, 72
    %v528 = vpop.permute.xlu0 %527
    %529 = vrot.lane.b32.xlu0 %v211, 72
    %v530 = vpop.permute.xlu0 %529
    %v531 = vsel %vm225, %v524, 0
    %v533 = vsel %vm225, %v526, 0
    %v535 = vsel %vm225, %v528, 0
    %v537 = vsel %vm225, %v530, 0
    %539 = vmatpush.xpose.msra.mxu0 0.0
    %540 = vmatpush.xpose.msra.mxu0 0.0
    %541 = vmatpush.xpose.msra.mxu0 0.0
    %542 = vmatpush.xpose.msra.mxu0 0.0
    %543 = vmatpush.xpose.msra.mxu0 0.0
    %544 = vmatpush.xpose.msra.mxu0 0.0
    %545 = vmatpush.xpose.msra.mxu0 0.0
    %546 = vmatpush.xpose.msra.mxu0 0.0
    %547 = vmatpush.xpose.msra.mxu0 0.0
    %548 = vmatpush.xpose.msra.mxu0 0.0
    %549 = vmatpush.xpose.msra.mxu0 0.0
    %550 = vmatpush.xpose.msra.mxu0 0.0
    %551 = vmatpush.xpose.msra.mxu0 0.0
    %552 = vmatpush.xpose.msra.mxu0 0.0
    %553 = vmatpush.xpose.msra.mxu0 %v537
    %554 = vmatpush.xpose.msra.mxu0 %v535
    %555 = vmatmul.f32.gmra.mxu0 %v531
    %v556 = vpop.f32.mrf.mxu0
    %v557 = vadd.f32 0.0, %v556
    %558 = vmatmul.f32.gmra.mxu0 %v533
    %v559 = vpop.f32.mrf.mxu0
    %v560 = vadd.f32 0.0, %v559
    %561 = vdwg.mxu0
    %v562 = vmul.f32 %v557, 0.35355338
    %v563 = vmul.f32 %v560, 0.35355338
    %v564 = vadd.f32 %v562, %v149
    %v565 = vadd.f32 %v563, %v150
    %v566 = vsel %vm263, %v564, -inf
    %567 = vmax.xlane.f32.xlu0 %v566
    %v568 = vpop.xlane.xlu0 %567
    %v569 = vsel %vm263, %v565, -inf
    %570 = vmax.xlane.f32.xlu0 %v569
    %v571 = vpop.xlane.xlu0 %570
    %v572 = vsub.f32 %v564, %v568
    %v573 = vsub.f32 %v565, %v571
    %v574 = vmul.f32 %v572, 1.442695
    %v575 = vpow.pop %v574
    %v576 = vmul.f32 %v573, 1.442695
    %v577 = vpow.pop %v576
    %v578 = vsel %vm263, %v575, 0.0
    %579 = vadd.xlane.f32.xlu0 %v578
    %v580 = vpop.xlane.xlu0 %579
    %v581 = vsel %vm263, %v577, 0.0
    %582 = vadd.xlane.f32.xlu0 %v581
    %v583 = vpop.xlane.xlu0 %582
    %v584 = vrcp.pop %v580
    %v585 = vrcp.pop %v583
    %v586 = vmul.f32 %v575, %v584
    %v587 = vmul.f32 %v577, %v585
    %588 = vrot.lane.b32.xlu0 %v217, 40
    %v589 = vpop.permute.xlu0 %588
    %590 = vrot.lane.b32.xlu0 %v218, 40
    %v591 = vpop.permute.xlu0 %590
    %v595 = vsel %vm263, %v586, 0
    %v598 = vsel %vm263, %v587, 0
    %600 = vmatpush.msra.mxu0 0.0
    %601 = vmatpush.msra.mxu0 0.0
    %602 = vmatpush.msra.mxu0 0.0
    %603 = vmatpush.msra.mxu0 0.0
    %604 = vmatpush.msra.mxu0 0.0
    %605 = vmatpush.msra.mxu0 0.0
    %606 = vmatpush.msra.mxu0 0.0
    %607 = vmatpush.msra.mxu0 0.0
    %608 = vmatpush.msra.mxu0 0.0
    %609 = vmatpush.msra.mxu0 0.0
    %610 = vmatpush.msra.mxu0 0.0
    %611 = vmatpush.msra.mxu0 0.0
    %612 = vmatpush.msra.mxu0 0.0
    %613 = vmatpush.msra.mxu0 0.0
    %614 = vmatpush.msra.mxu0 %v591
    %615 = vmatpush.msra.mxu0 %v589
    %616 = vmatmul.f32.gmra.mxu0 %v595
    %v617 = vpop.f32.mrf.mxu0
    %v618 = vadd.f32 0.0, %v617
    %619 = vmatmul.f32.gmra.mxu0 %v598
    %v620 = vpop.f32.mrf.mxu0
    %v621 = vadd.f32 0.0, %v620
    %622 = vdwg.mxu0
    %625 = vrot.lane.b32.xlu0 %v418, 8
    %v626 = vpop.permute.xlu0 %625
    %627 = vrot.lane.b32.xlu0 %v421, 8
    %v628 = vpop.permute.xlu0 %627
    %633 = vrot.lane.b32.xlu0 %v518, 16
    %v634 = vpop.permute.xlu0 %633
    %635 = vrot.lane.b32.xlu0 %v521, 16
    %v636 = vpop.permute.xlu0 %635
    %641 = vrot.lane.b32.xlu0 %v618, 24
    %v642 = vpop.permute.xlu0 %641
    %643 = vrot.lane.b32.xlu0 %v621, 24
    %v644 = vpop.permute.xlu0 %643
    %v647 = vsel %vm225, %v318, %v626
    %v648 = vsel %vm225, %v321, %v628
    %v649 = vsel %vm263, %v647, %v634
    %v650 = vsel %vm263, %v648, %v636
    %vm651 = vcmask 195584
    %v652 = vsel %vm651, %v649, %v642
    %v653 = vsel %vm651, %v650, %v644
    %v654 = vperm.slane %v171, 3
    %v656 = vsel %vm91, %v652, 0
    %v659 = vsel %vm91, %v653, 0
    %661 = vmatpush.msra.mxu0 0.0
    %662 = vmatpush.msra.mxu0 0.0
    %663 = vmatpush.msra.mxu0 0.0
    %664 = vmatpush.msra.mxu0 0.0
    %665 = vmatpush.msra.mxu0 0.0
    %666 = vmatpush.msra.mxu0 0.0
    %667 = vmatpush.msra.mxu0 0.0
    %668 = vmatpush.msra.mxu0 0.0
    %669 = vmatpush.msra.mxu0 0.0
    %670 = vmatpush.msra.mxu0 0.0
    %671 = vmatpush.msra.mxu0 0.0
    %672 = vmatpush.msra.mxu0 0.0
    %673 = vmatpush.msra.mxu0 %v158
    %674 = vmatpush.msra.mxu0 %v157
    %675 = vmatpush.msra.mxu0 %v156
    %676 = vmatpush.msra.mxu0 %v155
    %677 = vmatmul.f32.gmra.mxu0 %v656
    %v678 = vpop.f32.mrf.mxu0
    %v679 = vadd.f32 %v654, %v678
    %680 = vmatmul.f32.gmra.mxu0 %v659
    %v681 = vpop.f32.mrf.mxu0
    %v682 = vadd.f32 %v654, %v681
    %683 = vdwg.mxu0
    %v684 = vadd.f32 %v679, %v147
    %v685 = vadd.f32 %v682, %v148
    %v686 = vsel %vm91, %v684, 0.0
    %687 = vadd.xlane.f32.xlu0 %v686
    %v688 = vpop.xlane.xlu0 %687
    %v689 = vsel %vm91, %v685, 0.0
    %690 = vadd.xlane.f32.xlu0 %v689
    %v691 = vpop.xlane.xlu0 %690
    %v692 = vmul.f32 %v688, %v104
    %v693 = vmul.f32 %v691, %v104
    %v694 = vsub.f32 %v684, %v692
    %v695 = vsub.f32 %v685, %v693
    %v696 = vmul.f32 %v694, %v694
    %v697 = vmul.f32 %v695, %v695
    %v698 = vsel %vm91, %v696, 0.0
    %699 = vadd.xlane.f32.xlu0 %v698
    %v700 = vpop.xlane.xlu0 %699
    %v701 = vsel %vm91, %v697, 0.0
    %702 = vadd.xlane.f32.xlu0 %v701
    %v703 = vpop.xlane.xlu0 %702
    %v704 = vmul.f32 %v700, %v104
    %v705 = vmul.f32 %v703, %v104
    %v706 = vadd.f32 %v704, 1e-12
    %v707 = vadd.f32 %v705, 1e-12
    %v708 = vrsqrt.pop %v706
    %v709 = vmul.f32 %v708, %v706
    %v710 = vmul.f32 %v709, %v708
    %v711 = vmul.f32 0.5, %v710
    %v712 = vsub.f32 1.5, %v711
    %v713 = vmul.f32 %v708, %v712
    %vm714 = vweird.f32 %v706
    %vm715 = vweird.f32 %v708
    %vm716 = vmor %vm714, %vm715
    %v717 = vsel %vm716, %v708, %v713
    %v718 = vrsqrt.pop %v707
    %v719 = vmul.f32 %v718, %v707
    %v720 = vmul.f32 %v719, %v718
    %v721 = vmul.f32 0.5, %v720
    %v722 = vsub.f32 1.5, %v721
    %v723 = vmul.f32 %v718, %v722
    %vm724 = vweird.f32 %v707
    %vm725 = vweird.f32 %v718
    %vm726 = vmor %vm724, %vm725
    %v727 = vsel %vm726, %v718, %v723
    %v728 = vmul.f32 %v694, %v717
    %v729 = vmul.f32 %v695, %v727
    %v730 = vperm.slane %v171, 4
    %v731 = vmul.f32 %v728, %v730
    %v732 = vmul.f32 %v729, %v730
    %v733 = vperm.slane %v171, 5
    %v734 = vadd.f32 %v731, %v733
    %v735 = vadd.f32 %v732, %v733
    %v736 = vperm.slane %v171, 6
    %v738 = vsel %vm91, %v734, 0
    %v741 = vsel %vm91, %v735, 0
    %743 = vmatpush.msra.mxu0 0.0
    %744 = vmatpush.msra.mxu0 0.0
    %745 = vmatpush.msra.mxu0 0.0
    %746 = vmatpush.msra.mxu0 0.0
    %747 = vmatpush.msra.mxu0 0.0
    %748 = vmatpush.msra.mxu0 0.0
    %749 = vmatpush.msra.mxu0 0.0
    %750 = vmatpush.msra.mxu0 0.0
    %751 = vmatpush.msra.mxu0 0.0
    %752 = vmatpush.msra.mxu0 0.0
    %753 = vmatpush.msra.mxu0 0.0
    %754 = vmatpush.msra.mxu0 0.0
    %755 = vmatpush.msra.mxu0 %v162
    %756 = vmatpush.msra.mxu0 %v161
    %757 = vmatpush.msra.mxu0 %v160
    %758 = vmatpush.msra.mxu0 %v159
    %759 = vmatmul.f32.gmra.mxu0 %v738
    %v760 = vpop.f32.mrf.mxu0
    %v761 = vadd.f32 %v736, %v760
    %762 = vmatmul.f32.gmra.mxu0 %v741
    %v763 = vpop.f32.mrf.mxu0
    %v764 = vadd.f32 %v736, %v763
    %765 = vdwg.mxu0
    %v766 = vmul.f32 %v761, 0.5
    %v767 = vmul.f32 %v764, 0.5
    %v768 = vmul.f32 %v761, 0.044715
    %v769 = vmul.f32 %v764, 0.044715
    %v770 = vmul.f32 %v768, %v761
    %v771 = vmul.f32 %v769, %v764
    %v772 = vmul.f32 %v770, %v761
    %v773 = vmul.f32 %v771, %v764
    %v774 = vadd.f32 %v761, %v772
    %v775 = vadd.f32 %v764, %v773
    %v776 = vmul.f32 %v774, 0.7978846
    %v777 = vmul.f32 %v775, 0.7978846
    %v778 = vtanh.pop %v776
    %v779 = vtanh.pop %v777
    %v780 = vadd.f32 %v778, 1.0
    %v781 = vadd.f32 %v779, 1.0
    %v782 = vmul.f32 %v766, %v780
    %v783 = vmul.f32 %v767, %v781
    %v784 = vperm.slane %v171, 7
    %vm785 = vcmask 523264
    %v787 = vsel %vm785, %v782, 0
    %v790 = vsel %vm785, %v783, 0
    %792 = vmatpush.msra.mxu0 0.0
    %793 = vmatpush.msra.mxu0 0.0
    %794 = vmatpush.msra.mxu0 0.0
    %795 = vmatpush.msra.mxu0 0.0
    %796 = vmatpush.msra.mxu0 0.0
    %797 = vmatpush.msra.mxu0 0.0
    %798 = vmatpush.msra.mxu0 0.0
    %799 = vmatpush.msra.mxu0 0.0
    %800 = vmatpush.msra.mxu0 %v170
    %801 = vmatpush.msra.mxu0 %v169
    %802 = vmatpush.msra.mxu0 %v168
    %803 = vmatpush.msra.mxu0 %v167
    %804 = vmatpush.msra.mxu0 %v166
    %805 = vmatpush.msra.mxu0 %v165
    %806 = vmatpush.msra.mxu0 %v164
    %807 = vmatpush.msra.mxu0 %v163
    %808 = vmatmul.f32.gmra.mxu0 %v787
    %v809 = vpop.f32.mrf.mxu0
    %v810 = vadd.f32 %v784, %v809
    %811 = vmatmul.f32.gmra.mxu0 %v790
    %v812 = vpop.f32.mrf.mxu0
    %v813 = vadd.f32 %v784, %v812
    %814 = vdwg.mxu0
    %v815 = vadd.f32 %v810, %v734
    %v816 = vadd.f32 %v813, %v735
    %v817 = vsel %vm91, %v815, 0.0
    %818 = vadd.xlane.f32.xlu0 %v817
    %v819 = vpop.xlane.xlu0 %818
    %v820 = vsel %vm91, %v816, 0.0
    %821 = vadd.xlane.f32.xlu0 %v820
    %v822 = vpop.xlane.xlu0 %821
    %v823 = vmul.f32 %v819, %v104
    %v824 = vmul.f32 %v822, %v104
    %v825 = vsub.f32 %v815, %v823
    %v826 = vsub.f32 %v816, %v824
    %v827 = vmul.f32 %v825, %v825
    %v828 = vmul.f32 %v826, %v826
    %v829 = vsel %vm91, %v827, 0.0
    %830 = vadd.xlane.f32.xlu0 %v829
    %v831 = vpop.xlane.xlu0 %830
    %v832 = vsel %vm91, %v828, 0.0
    %833 = vadd.xlane.f32.xlu0 %v832
    %v834 = vpop.xlane.xlu0 %833
    %v835 = vmul.f32 %v831, %v104
    %v836 = vmul.f32 %v834, %v104
    %v837 = vadd.f32 %v835, 1e-12
    %v838 = vadd.f32 %v836, 1e-12
    %v839 = vrsqrt.pop %v837
    %v840 = vmul.f32 %v839, %v837
    %v841 = vmul.f32 %v840, %v839
    %v842 = vmul.f32 0.5, %v841
    %v843 = vsub.f32 1.5, %v842
    %v844 = vmul.f32 %v839, %v843
    %vm845 = vweird.f32 %v837
    %vm846 = vweird.f32 %v839
    %vm847 = vmor %vm845, %vm846
    %v848 = vsel %vm847, %v839, %v844
    %v849 = vrsqrt.pop %v838
    %v850 = vmul.f32 %v849, %v838
    %v851 = vmul.f32 %v850, %v849
    %v852 = vmul.f32 0.5, %v851
    %v853 = vsub.f32 1.5, %v852
    %v854 = vmul.f32 %v849, %v853
    %vm855 = vweird.f32 %v838
    %vm856 = vweird.f32 %v849
    %vm857 = vmor %vm855, %vm856
    %v858 = vsel %vm857, %v849, %v854
    %v859 = vmul.f32 %v825, %v848
    %v860 = vmul.f32 %v826, %v858
    %v861 = vperm.slane %v172, 0
    %v862 = vmul.f32 %v859, %v861
    %v863 = vmul.f32 %v860, %v861
    %v864 = vperm.slane %v172, 1
    %v865 = vadd.f32 %v862, %v864
    %v866 = vadd.f32 %v863, %v864
    %s867 = scalar_lea.vmem %s6, 32
    %v868 = vld [vmem:[%s867] sm:$0xff]
    %v869 = vld [vmem:[%s867 + $0x8] sm:$0xff]
    %v870 = vld [vmem:[%s867 + $0x10] sm:$0xff]
    %v871 = vld [vmem:[%s867 + $0x18] sm:$0xff]
    %s872 = scalar_lea.vmem %s7, 32
    %v873 = vld [vmem:[%s872] sm:$0xff]
    %v874 = vld [vmem:[%s872 + $0x8] sm:$0xff]
    %v875 = vld [vmem:[%s872 + $0x10] sm:$0xff]
    %v876 = vld [vmem:[%s872 + $0x18] sm:$0xff]
    %s877 = scalar_lea.vmem %s8, 32
    %v878 = vld [vmem:[%s877] sm:$0xff]
    %v879 = vld [vmem:[%s877 + $0x8] sm:$0xff]
    %v880 = vld [vmem:[%s877 + $0x10] sm:$0xff]
    %v881 = vld [vmem:[%s877 + $0x18] sm:$0xff]
    %s882 = scalar_lea.vmem %s9, 64
    %v883 = vld [vmem:[%s882] sm:$0xff]
    %v884 = vld [vmem:[%s882 + $0x8] sm:$0xff]
    %v885 = vld [vmem:[%s882 + $0x10] sm:$0xff]
    %v886 = vld [vmem:[%s882 + $0x18] sm:$0xff]
    %v887 = vld [vmem:[%s882 + $0x20] sm:$0xff]
    %v888 = vld [vmem:[%s882 + $0x28] sm:$0xff]
    %v889 = vld [vmem:[%s882 + $0x30] sm:$0xff]
    %v890 = vld [vmem:[%s882 + $0x38] sm:$0xff]
    %s891 = scalar_lea.vmem %s10, 16
    %v892 = vld [vmem:[%s891] sm:$0xff]
    %v893 = vld [vmem:[%s891 + $0x8] sm:$0xff]
    %v895 = vsel %vm91, %v865, 0
    %v898 = vsel %vm91, %v866, 0
    %900 = vmatpush.msra.mxu0 0.0
    %901 = vmatpush.msra.mxu0 0.0
    %902 = vmatpush.msra.mxu0 0.0
    %903 = vmatpush.msra.mxu0 0.0
    %904 = vmatpush.msra.mxu0 0.0
    %905 = vmatpush.msra.mxu0 0.0
    %906 = vmatpush.msra.mxu0 0.0
    %907 = vmatpush.msra.mxu0 0.0
    %908 = vmatpush.msra.mxu0 0.0
    %909 = vmatpush.msra.mxu0 0.0
    %910 = vmatpush.msra.mxu0 0.0
    %911 = vmatpush.msra.mxu0 0.0
    %912 = vmatpush.msra.mxu0 %v871
    %913 = vmatpush.msra.mxu0 %v870
    %914 = vmatpush.msra.mxu0 %v869
    %915 = vmatpush.msra.mxu0 %v868
    %916 = vmatmul.f32.gmra.mxu0 %v895
    %v917 = vpop.f32.mrf.mxu0
    %v918 = vadd.f32 0.0, %v917
    %919 = vmatmul.f32.gmra.mxu0 %v898
    %v920 = vpop.f32.mrf.mxu0
    %v921 = vadd.f32 0.0, %v920
    %922 = vdwg.mxu0
    %v923 = vperm.slane %v892, 0
    %v924 = vadd.f32 %v918, %v923
    %v925 = vadd.f32 %v921, %v923
    %v926 = vperm.slane %v892, 1
    %928 = vrot.lane.b32.xlu0 %v926, 32
    %v929 = vpop.permute.xlu0 %928
    %v931 = vadd.f32 %v918, %v929
    %v932 = vadd.f32 %v921, %v929
    %v933 = vperm.slane %v892, 2
    %935 = vrot.lane.b32.xlu0 %v933, 64
    %v936 = vpop.permute.xlu0 %935
    %v938 = vadd.f32 %v918, %v936
    %v939 = vadd.f32 %v921, %v936
    %942 = vrot.lane.b32.xlu0 %v931, 96
    %v943 = vpop.permute.xlu0 %942
    %944 = vrot.lane.b32.xlu0 %v932, 96
    %v945 = vpop.permute.xlu0 %944
    %v947 = vsel %vm225, %v924, 0
    %v950 = vsel %vm225, %v925, 0
    %v952 = vsel %vm225, %v943, 0
    %v954 = vsel %vm225, %v945, 0
    %956 = vmatpush.xpose.msra.mxu0 0.0
    %957 = vmatpush.xpose.msra.mxu0 0.0
    %958 = vmatpush.xpose.msra.mxu0 0.0
    %959 = vmatpush.xpose.msra.mxu0 0.0
    %960 = vmatpush.xpose.msra.mxu0 0.0
    %961 = vmatpush.xpose.msra.mxu0 0.0
    %962 = vmatpush.xpose.msra.mxu0 0.0
    %963 = vmatpush.xpose.msra.mxu0 0.0
    %964 = vmatpush.xpose.msra.mxu0 0.0
    %965 = vmatpush.xpose.msra.mxu0 0.0
    %966 = vmatpush.xpose.msra.mxu0 0.0
    %967 = vmatpush.xpose.msra.mxu0 0.0
    %968 = vmatpush.xpose.msra.mxu0 0.0
    %969 = vmatpush.xpose.msra.mxu0 0.0
    %970 = vmatpush.xpose.msra.mxu0 %v954
    %971 = vmatpush.xpose.msra.mxu0 %v952
    %972 = vmatmul.f32.gmra.mxu0 %v947
    %v973 = vpop.f32.mrf.mxu0
    %v974 = vadd.f32 0.0, %v973
    %975 = vmatmul.f32.gmra.mxu0 %v950
    %v976 = vpop.f32.mrf.mxu0
    %v977 = vadd.f32 0.0, %v976
    %978 = vdwg.mxu0
    %v979 = vmul.f32 %v974, 0.35355338
    %v980 = vmul.f32 %v977, 0.35355338
    %v981 = vadd.f32 %v979, %v149
    %v982 = vadd.f32 %v980, %v150
    %v983 = vsel %vm263, %v981, -inf
    %984 = vmax.xlane.f32.xlu0 %v983
    %v985 = vpop.xlane.xlu0 %984
    %v986 = vsel %vm263, %v982, -inf
    %987 = vmax.xlane.f32.xlu0 %v986
    %v988 = vpop.xlane.xlu0 %987
    %v989 = vsub.f32 %v981, %v985
    %v990 = vsub.f32 %v982, %v988
    %v991 = vmul.f32 %v989, 1.442695
    %v992 = vpow.pop %v991
    %v993 = vmul.f32 %v990, 1.442695
    %v994 = vpow.pop %v993
    %v995 = vsel %vm263, %v992, 0.0
    %996 = vadd.xlane.f32.xlu0 %v995
    %v997 = vpop.xlane.xlu0 %996
    %v998 = vsel %vm263, %v994, 0.0
    %999 = vadd.xlane.f32.xlu0 %v998
    %v1000 = vpop.xlane.xlu0 %999
    %v1001 = vrcp.pop %v997
    %v1002 = vrcp.pop %v1000
    %v1003 = vmul.f32 %v992, %v1001
    %v1004 = vmul.f32 %v994, %v1002
    %1007 = vrot.lane.b32.xlu0 %v938, 64
    %v1008 = vpop.permute.xlu0 %1007
    %1009 = vrot.lane.b32.xlu0 %v939, 64
    %v1010 = vpop.permute.xlu0 %1009
    %v1014 = vsel %vm263, %v1003, 0
    %v1017 = vsel %vm263, %v1004, 0
    %1019 = vmatpush.msra.mxu0 0.0
    %1020 = vmatpush.msra.mxu0 0.0
    %1021 = vmatpush.msra.mxu0 0.0
    %1022 = vmatpush.msra.mxu0 0.0
    %1023 = vmatpush.msra.mxu0 0.0
    %1024 = vmatpush.msra.mxu0 0.0
    %1025 = vmatpush.msra.mxu0 0.0
    %1026 = vmatpush.msra.mxu0 0.0
    %1027 = vmatpush.msra.mxu0 0.0
    %1028 = vmatpush.msra.mxu0 0.0
    %1029 = vmatpush.msra.mxu0 0.0
    %1030 = vmatpush.msra.mxu0 0.0
    %1031 = vmatpush.msra.mxu0 0.0
    %1032 = vmatpush.msra.mxu0 0.0
    %1033 = vmatpush.msra.mxu0 %v1010
    %1034 = vmatpush.msra.mxu0 %v1008
    %1035 = vmatmul.f32.gmra.mxu0 %v1014
    %v1036 = vpop.f32.mrf.mxu0
    %v1037 = vadd.f32 0.0, %v1036
    %1038 = vmatmul.f32.gmra.mxu0 %v1017
    %v1039 = vpop.f32.mrf.mxu0
    %v1040 = vadd.f32 0.0, %v1039
    %1041 = vdwg.mxu0
    %1042 = vrot.lane.b32.xlu0 %v924, 120
    %v1043 = vpop.permute.xlu0 %1042
    %1044 = vrot.lane.b32.xlu0 %v925, 120
    %v1045 = vpop.permute.xlu0 %1044
    %1046 = vrot.lane.b32.xlu0 %v931, 88
    %v1047 = vpop.permute.xlu0 %1046
    %1048 = vrot.lane.b32.xlu0 %v932, 88
    %v1049 = vpop.permute.xlu0 %1048
    %v1050 = vsel %vm225, %v1043, 0
    %v1052 = vsel %vm225, %v1045, 0
    %v1054 = vsel %vm225, %v1047, 0
    %v1056 = vsel %vm225, %v1049, 0
    %1058 = vmatpush.xpose.msra.mxu0 0.0
    %1059 = vmatpush.xpose.msra.mxu0 0.0
    %1060 = vmatpush.xpose.msra.mxu0 0.0
    %1061 = vmatpush.xpose.msra.mxu0 0.0
    %1062 = vmatpush.xpose.msra.mxu0 0.0
    %1063 = vmatpush.xpose.msra.mxu0 0.0
    %1064 = vmatpush.xpose.msra.mxu0 0.0
    %1065 = vmatpush.xpose.msra.mxu0 0.0
    %1066 = vmatpush.xpose.msra.mxu0 0.0
    %1067 = vmatpush.xpose.msra.mxu0 0.0
    %1068 = vmatpush.xpose.msra.mxu0 0.0
    %1069 = vmatpush.xpose.msra.mxu0 0.0
    %1070 = vmatpush.xpose.msra.mxu0 0.0
    %1071 = vmatpush.xpose.msra.mxu0 0.0
    %1072 = vmatpush.xpose.msra.mxu0 %v1056
    %1073 = vmatpush.xpose.msra.mxu0 %v1054
    %1074 = vmatmul.f32.gmra.mxu0 %v1050
    %v1075 = vpop.f32.mrf.mxu0
    %v1076 = vadd.f32 0.0, %v1075
    %1077 = vmatmul.f32.gmra.mxu0 %v1052
    %v1078 = vpop.f32.mrf.mxu0
    %v1079 = vadd.f32 0.0, %v1078
    %1080 = vdwg.mxu0
    %v1081 = vmul.f32 %v1076, 0.35355338
    %v1082 = vmul.f32 %v1079, 0.35355338
    %v1083 = vadd.f32 %v1081, %v149
    %v1084 = vadd.f32 %v1082, %v150
    %v1085 = vsel %vm263, %v1083, -inf
    %1086 = vmax.xlane.f32.xlu0 %v1085
    %v1087 = vpop.xlane.xlu0 %1086
    %v1088 = vsel %vm263, %v1084, -inf
    %1089 = vmax.xlane.f32.xlu0 %v1088
    %v1090 = vpop.xlane.xlu0 %1089
    %v1091 = vsub.f32 %v1083, %v1087
    %v1092 = vsub.f32 %v1084, %v1090
    %v1093 = vmul.f32 %v1091, 1.442695
    %v1094 = vpow.pop %v1093
    %v1095 = vmul.f32 %v1092, 1.442695
    %v1096 = vpow.pop %v1095
    %v1097 = vsel %vm263, %v1094, 0.0
    %1098 = vadd.xlane.f32.xlu0 %v1097
    %v1099 = vpop.xlane.xlu0 %1098
    %v1100 = vsel %vm263, %v1096, 0.0
    %1101 = vadd.xlane.f32.xlu0 %v1100
    %v1102 = vpop.xlane.xlu0 %1101
    %v1103 = vrcp.pop %v1099
    %v1104 = vrcp.pop %v1102
    %v1105 = vmul.f32 %v1094, %v1103
    %v1106 = vmul.f32 %v1096, %v1104
    %1107 = vrot.lane.b32.xlu0 %v938, 56
    %v1108 = vpop.permute.xlu0 %1107
    %1109 = vrot.lane.b32.xlu0 %v939, 56
    %v1110 = vpop.permute.xlu0 %1109
    %v1114 = vsel %vm263, %v1105, 0
    %v1117 = vsel %vm263, %v1106, 0
    %1119 = vmatpush.msra.mxu0 0.0
    %1120 = vmatpush.msra.mxu0 0.0
    %1121 = vmatpush.msra.mxu0 0.0
    %1122 = vmatpush.msra.mxu0 0.0
    %1123 = vmatpush.msra.mxu0 0.0
    %1124 = vmatpush.msra.mxu0 0.0
    %1125 = vmatpush.msra.mxu0 0.0
    %1126 = vmatpush.msra.mxu0 0.0
    %1127 = vmatpush.msra.mxu0 0.0
    %1128 = vmatpush.msra.mxu0 0.0
    %1129 = vmatpush.msra.mxu0 0.0
    %1130 = vmatpush.msra.mxu0 0.0
    %1131 = vmatpush.msra.mxu0 0.0
    %1132 = vmatpush.msra.mxu0 0.0
    %1133 = vmatpush.msra.mxu0 %v1110
    %1134 = vmatpush.msra.mxu0 %v1108
    %1135 = vmatmul.f32.gmra.mxu0 %v1114
    %v1136 = vpop.f32.mrf.mxu0
    %v1137 = vadd.f32 0.0, %v1136
    %1138 = vmatmul.f32.gmra.mxu0 %v1117
    %v1139 = vpop.f32.mrf.mxu0
    %v1140 = vadd.f32 0.0, %v1139
    %1141 = vdwg.mxu0
    %1142 = vrot.lane.b32.xlu0 %v924, 112
    %v1143 = vpop.permute.xlu0 %1142
    %1144 = vrot.lane.b32.xlu0 %v925, 112
    %v1145 = vpop.permute.xlu0 %1144
    %1146 = vrot.lane.b32.xlu0 %v931, 80
    %v1147 = vpop.permute.xlu0 %1146
    %1148 = vrot.lane.b32.xlu0 %v932, 80
    %v1149 = vpop.permute.xlu0 %1148
    %v1150 = vsel %vm225, %v1143, 0
    %v1152 = vsel %vm225, %v1145, 0
    %v1154 = vsel %vm225, %v1147, 0
    %v1156 = vsel %vm225, %v1149, 0
    %1158 = vmatpush.xpose.msra.mxu0 0.0
    %1159 = vmatpush.xpose.msra.mxu0 0.0
    %1160 = vmatpush.xpose.msra.mxu0 0.0
    %1161 = vmatpush.xpose.msra.mxu0 0.0
    %1162 = vmatpush.xpose.msra.mxu0 0.0
    %1163 = vmatpush.xpose.msra.mxu0 0.0
    %1164 = vmatpush.xpose.msra.mxu0 0.0
    %1165 = vmatpush.xpose.msra.mxu0 0.0
    %1166 = vmatpush.xpose.msra.mxu0 0.0
    %1167 = vmatpush.xpose.msra.mxu0 0.0
    %1168 = vmatpush.xpose.msra.mxu0 0.0
    %1169 = vmatpush.xpose.msra.mxu0 0.0
    %1170 = vmatpush.xpose.msra.mxu0 0.0
    %1171 = vmatpush.xpose.msra.mxu0 0.0
    %1172 = vmatpush.xpose.msra.mxu0 %v1156
    %1173 = vmatpush.xpose.msra.mxu0 %v1154
    %1174 = vmatmul.f32.gmra.mxu0 %v1150
    %v1175 = vpop.f32.mrf.mxu0
    %v1176 = vadd.f32 0.0, %v1175
    %1177 = vmatmul.f32.gmra.mxu0 %v1152
    %v1178 = vpop.f32.mrf.mxu0
    %v1179 = vadd.f32 0.0, %v1178
    %1180 = vdwg.mxu0
    %v1181 = vmul.f32 %v1176, 0.35355338
    %v1182 = vmul.f32 %v1179, 0.35355338
    %v1183 = vadd.f32 %v1181, %v149
    %v1184 = vadd.f32 %v1182, %v150
    %v1185 = vsel %vm263, %v1183, -inf
    %1186 = vmax.xlane.f32.xlu0 %v1185
    %v1187 = vpop.xlane.xlu0 %1186
    %v1188 = vsel %vm263, %v1184, -inf
    %1189 = vmax.xlane.f32.xlu0 %v1188
    %v1190 = vpop.xlane.xlu0 %1189
    %v1191 = vsub.f32 %v1183, %v1187
    %v1192 = vsub.f32 %v1184, %v1190
    %v1193 = vmul.f32 %v1191, 1.442695
    %v1194 = vpow.pop %v1193
    %v1195 = vmul.f32 %v1192, 1.442695
    %v1196 = vpow.pop %v1195
    %v1197 = vsel %vm263, %v1194, 0.0
    %1198 = vadd.xlane.f32.xlu0 %v1197
    %v1199 = vpop.xlane.xlu0 %1198
    %v1200 = vsel %vm263, %v1196, 0.0
    %1201 = vadd.xlane.f32.xlu0 %v1200
    %v1202 = vpop.xlane.xlu0 %1201
    %v1203 = vrcp.pop %v1199
    %v1204 = vrcp.pop %v1202
    %v1205 = vmul.f32 %v1194, %v1203
    %v1206 = vmul.f32 %v1196, %v1204
    %1207 = vrot.lane.b32.xlu0 %v938, 48
    %v1208 = vpop.permute.xlu0 %1207
    %1209 = vrot.lane.b32.xlu0 %v939, 48
    %v1210 = vpop.permute.xlu0 %1209
    %v1214 = vsel %vm263, %v1205, 0
    %v1217 = vsel %vm263, %v1206, 0
    %1219 = vmatpush.msra.mxu0 0.0
    %1220 = vmatpush.msra.mxu0 0.0
    %1221 = vmatpush.msra.mxu0 0.0
    %1222 = vmatpush.msra.mxu0 0.0
    %1223 = vmatpush.msra.mxu0 0.0
    %1224 = vmatpush.msra.mxu0 0.0
    %1225 = vmatpush.msra.mxu0 0.0
    %1226 = vmatpush.msra.mxu0 0.0
    %1227 = vmatpush.msra.mxu0 0.0
    %1228 = vmatpush.msra.mxu0 0.0
    %1229 = vmatpush.msra.mxu0 0.0
    %1230 = vmatpush.msra.mxu0 0.0
    %1231 = vmatpush.msra.mxu0 0.0
    %1232 = vmatpush.msra.mxu0 0.0
    %1233 = vmatpush.msra.mxu0 %v1210
    %1234 = vmatpush.msra.mxu0 %v1208
    %1235 = vmatmul.f32.gmra.mxu0 %v1214
    %v1236 = vpop.f32.mrf.mxu0
    %v1237 = vadd.f32 0.0, %v1236
    %1238 = vmatmul.f32.gmra.mxu0 %v1217
    %v1239 = vpop.f32.mrf.mxu0
    %v1240 = vadd.f32 0.0, %v1239
    %1241 = vdwg.mxu0
    %1242 = vrot.lane.b32.xlu0 %v924, 104
    %v1243 = vpop.permute.xlu0 %1242
    %1244 = vrot.lane.b32.xlu0 %v925, 104
    %v1245 = vpop.permute.xlu0 %1244
    %1246 = vrot.lane.b32.xlu0 %v931, 72
    %v1247 = vpop.permute.xlu0 %1246
    %1248 = vrot.lane.b32.xlu0 %v932, 72
    %v1249 = vpop.permute.xlu0 %1248
    %v1250 = vsel %vm225, %v1243, 0
    %v1252 = vsel %vm225, %v1245, 0
    %v1254 = vsel %vm225, %v1247, 0
    %v1256 = vsel %vm225, %v1249, 0
    %1258 = vmatpush.xpose.msra.mxu0 0.0
    %1259 = vmatpush.xpose.msra.mxu0 0.0
    %1260 = vmatpush.xpose.msra.mxu0 0.0
    %1261 = vmatpush.xpose.msra.mxu0 0.0
    %1262 = vmatpush.xpose.msra.mxu0 0.0
    %1263 = vmatpush.xpose.msra.mxu0 0.0
    %1264 = vmatpush.xpose.msra.mxu0 0.0
    %1265 = vmatpush.xpose.msra.mxu0 0.0
    %1266 = vmatpush.xpose.msra.mxu0 0.0
    %1267 = vmatpush.xpose.msra.mxu0 0.0
    %1268 = vmatpush.xpose.msra.mxu0 0.0
    %1269 = vmatpush.xpose.msra.mxu0 0.0
    %1270 = vmatpush.xpose.msra.mxu0 0.0
    %1271 = vmatpush.xpose.msra.mxu0 0.0
    %1272 = vmatpush.xpose.msra.mxu0 %v1256
    %1273 = vmatpush.xpose.msra.mxu0 %v1254
    %1274 = vmatmul.f32.gmra.mxu0 %v1250
    %v1275 = vpop.f32.mrf.mxu0
    %v1276 = vadd.f32 0.0, %v1275
    %1277 = vmatmul.f32.gmra.mxu0 %v1252
    %v1278 = vpop.f32.mrf.mxu0
    %v1279 = vadd.f32 0.0, %v1278
    %1280 = vdwg.mxu0
    %v1281 = vmul.f32 %v1276, 0.35355338
    %v1282 = vmul.f32 %v1279, 0.35355338
    %v1283 = vadd.f32 %v1281, %v149
    %v1284 = vadd.f32 %v1282, %v150
    %v1285 = vsel %vm263, %v1283, -inf
    %1286 = vmax.xlane.f32.xlu0 %v1285
    %v1287 = vpop.xlane.xlu0 %1286
    %v1288 = vsel %vm263, %v1284, -inf
    %1289 = vmax.xlane.f32.xlu0 %v1288
    %v1290 = vpop.xlane.xlu0 %1289
    %v1291 = vsub.f32 %v1283, %v1287
    %v1292 = vsub.f32 %v1284, %v1290
    %v1293 = vmul.f32 %v1291, 1.442695
    %v1294 = vpow.pop %v1293
    %v1295 = vmul.f32 %v1292, 1.442695
    %v1296 = vpow.pop %v1295
    %v1297 = vsel %vm263, %v1294, 0.0
    %1298 = vadd.xlane.f32.xlu0 %v1297
    %v1299 = vpop.xlane.xlu0 %1298
    %v1300 = vsel %vm263, %v1296, 0.0
    %1301 = vadd.xlane.f32.xlu0 %v1300
    %v1302 = vpop.xlane.xlu0 %1301
    %v1303 = vrcp.pop %v1299
    %v1304 = vrcp.pop %v1302
    %v1305 = vmul.f32 %v1294, %v1303
    %v1306 = vmul.f32 %v1296, %v1304
    %1307 = vrot.lane.b32.xlu0 %v938, 40
    %v1308 = vpop.permute.xlu0 %1307
    %1309 = vrot.lane.b32.xlu0 %v939, 40
    %v1310 = vpop.permute.xlu0 %1309
    %v1314 = vsel %vm263, %v1305, 0
    %v1317 = vsel %vm263, %v1306, 0
    %1319 = vmatpush.msra.mxu0 0.0
    %1320 = vmatpush.msra.mxu0 0.0
    %1321 = vmatpush.msra.mxu0 0.0
    %1322 = vmatpush.msra.mxu0 0.0
    %1323 = vmatpush.msra.mxu0 0.0
    %1324 = vmatpush.msra.mxu0 0.0
    %1325 = vmatpush.msra.mxu0 0.0
    %1326 = vmatpush.msra.mxu0 0.0
    %1327 = vmatpush.msra.mxu0 0.0
    %1328 = vmatpush.msra.mxu0 0.0
    %1329 = vmatpush.msra.mxu0 0.0
    %1330 = vmatpush.msra.mxu0 0.0
    %1331 = vmatpush.msra.mxu0 0.0
    %1332 = vmatpush.msra.mxu0 0.0
    %1333 = vmatpush.msra.mxu0 %v1310
    %1334 = vmatpush.msra.mxu0 %v1308
    %1335 = vmatmul.f32.gmra.mxu0 %v1314
    %v1336 = vpop.f32.mrf.mxu0
    %v1337 = vadd.f32 0.0, %v1336
    %1338 = vmatmul.f32.gmra.mxu0 %v1317
    %v1339 = vpop.f32.mrf.mxu0
    %v1340 = vadd.f32 0.0, %v1339
    %1341 = vdwg.mxu0
    %1344 = vrot.lane.b32.xlu0 %v1137, 8
    %v1345 = vpop.permute.xlu0 %1344
    %1346 = vrot.lane.b32.xlu0 %v1140, 8
    %v1347 = vpop.permute.xlu0 %1346
    %1352 = vrot.lane.b32.xlu0 %v1237, 16
    %v1353 = vpop.permute.xlu0 %1352
    %1354 = vrot.lane.b32.xlu0 %v1240, 16
    %v1355 = vpop.permute.xlu0 %1354
    %1360 = vrot.lane.b32.xlu0 %v1337, 24
    %v1361 = vpop.permute.xlu0 %1360
    %1362 = vrot.lane.b32.xlu0 %v1340, 24
    %v1363 = vpop.permute.xlu0 %1362
    %v1366 = vsel %vm225, %v1037, %v1345
    %v1367 = vsel %vm225, %v1040, %v1347
    %v1368 = vsel %vm263, %v1366, %v1353
    %v1369 = vsel %vm263, %v1367, %v1355
    %v1370 = vsel %vm651, %v1368, %v1361
    %v1371 = vsel %vm651, %v1369, %v1363
    %v1372 = vperm.slane %v892, 3
    %v1374 = vsel %vm91, %v1370, 0
    %v1377 = vsel %vm91, %v1371, 0
    %1379 = vmatpush.msra.mxu0 0.0
    %1380 = vmatpush.msra.mxu0 0.0
    %1381 = vmatpush.msra.mxu0 0.0
    %1382 = vmatpush.msra.mxu0 0.0
    %1383 = vmatpush.msra.mxu0 0.0
    %1384 = vmatpush.msra.mxu0 0.0
    %1385 = vmatpush.msra.mxu0 0.0
    %1386 = vmatpush.msra.mxu0 0.0
    %1387 = vmatpush.msra.mxu0 0.0
    %1388 = vmatpush.msra.mxu0 0.0
    %1389 = vmatpush.msra.mxu0 0.0
    %1390 = vmatpush.msra.mxu0 0.0
    %1391 = vmatpush.msra.mxu0 %v876
    %1392 = vmatpush.msra.mxu0 %v875
    %1393 = vmatpush.msra.mxu0 %v874
    %1394 = vmatpush.msra.mxu0 %v873
    %1395 = vmatmul.f32.gmra.mxu0 %v1374
    %v1396 = vpop.f32.mrf.mxu0
    %v1397 = vadd.f32 %v1372, %v1396
    %1398 = vmatmul.f32.gmra.mxu0 %v1377
    %v1399 = vpop.f32.mrf.mxu0
    %v1400 = vadd.f32 %v1372, %v1399
    %1401 = vdwg.mxu0
    %v1402 = vadd.f32 %v1397, %v865
    %v1403 = vadd.f32 %v1400, %v866
    %v1404 = vsel %vm91, %v1402, 0.0
    %1405 = vadd.xlane.f32.xlu0 %v1404
    %v1406 = vpop.xlane.xlu0 %1405
    %v1407 = vsel %vm91, %v1403, 0.0
    %1408 = vadd.xlane.f32.xlu0 %v1407
    %v1409 = vpop.xlane.xlu0 %1408
    %v1410 = vmul.f32 %v1406, %v104
    %v1411 = vmul.f32 %v1409, %v104
    %v1412 = vsub.f32 %v1402, %v1410
    %v1413 = vsub.f32 %v1403, %v1411
    %v1414 = vmul.f32 %v1412, %v1412
    %v1415 = vmul.f32 %v1413, %v1413
    %v1416 = vsel %vm91, %v1414, 0.0
    %1417 = vadd.xlane.f32.xlu0 %v1416
    %v1418 = vpop.xlane.xlu0 %1417
    %v1419 = vsel %vm91, %v1415, 0.0
    %1420 = vadd.xlane.f32.xlu0 %v1419
    %v1421 = vpop.xlane.xlu0 %1420
    %v1422 = vmul.f32 %v1418, %v104
    %v1423 = vmul.f32 %v1421, %v104
    %v1424 = vadd.f32 %v1422, 1e-12
    %v1425 = vadd.f32 %v1423, 1e-12
    %v1426 = vrsqrt.pop %v1424
    %v1427 = vmul.f32 %v1426, %v1424
    %v1428 = vmul.f32 %v1427, %v1426
    %v1429 = vmul.f32 0.5, %v1428
    %v1430 = vsub.f32 1.5, %v1429
    %v1431 = vmul.f32 %v1426, %v1430
    %vm1432 = vweird.f32 %v1424
    %vm1433 = vweird.f32 %v1426
    %vm1434 = vmor %vm1432, %vm1433
    %v1435 = vsel %vm1434, %v1426, %v1431
    %v1436 = vrsqrt.pop %v1425
    %v1437 = vmul.f32 %v1436, %v1425
    %v1438 = vmul.f32 %v1437, %v1436
    %v1439 = vmul.f32 0.5, %v1438
    %v1440 = vsub.f32 1.5, %v1439
    %v1441 = vmul.f32 %v1436, %v1440
    %vm1442 = vweird.f32 %v1425
    %vm1443 = vweird.f32 %v1436
    %vm1444 = vmor %vm1442, %vm1443
    %v1445 = vsel %vm1444, %v1436, %v1441
    %v1446 = vmul.f32 %v1412, %v1435
    %v1447 = vmul.f32 %v1413, %v1445
    %v1448 = vperm.slane %v892, 4
    %v1449 = vmul.f32 %v1446, %v1448
    %v1450 = vmul.f32 %v1447, %v1448
    %v1451 = vperm.slane %v892, 5
    %v1452 = vadd.f32 %v1449, %v1451
    %v1453 = vadd.f32 %v1450, %v1451
    %v1454 = vperm.slane %v892, 6
    %v1456 = vsel %vm91, %v1452, 0
    %v1459 = vsel %vm91, %v1453, 0
    %1461 = vmatpush.msra.mxu0 0.0
    %1462 = vmatpush.msra.mxu0 0.0
    %1463 = vmatpush.msra.mxu0 0.0
    %1464 = vmatpush.msra.mxu0 0.0
    %1465 = vmatpush.msra.mxu0 0.0
    %1466 = vmatpush.msra.mxu0 0.0
    %1467 = vmatpush.msra.mxu0 0.0
    %1468 = vmatpush.msra.mxu0 0.0
    %1469 = vmatpush.msra.mxu0 0.0
    %1470 = vmatpush.msra.mxu0 0.0
    %1471 = vmatpush.msra.mxu0 0.0
    %1472 = vmatpush.msra.mxu0 0.0
    %1473 = vmatpush.msra.mxu0 %v881
    %1474 = vmatpush.msra.mxu0 %v880
    %1475 = vmatpush.msra.mxu0 %v879
    %1476 = vmatpush.msra.mxu0 %v878
    %1477 = vmatmul.f32.gmra.mxu0 %v1456
    %v1478 = vpop.f32.mrf.mxu0
    %v1479 = vadd.f32 %v1454, %v1478
    %1480 = vmatmul.f32.gmra.mxu0 %v1459
    %v1481 = vpop.f32.mrf.mxu0
    %v1482 = vadd.f32 %v1454, %v1481
    %1483 = vdwg.mxu0
    %v1484 = vmul.f32 %v1479, 0.5
    %v1485 = vmul.f32 %v1482, 0.5
    %v1486 = vmul.f32 %v1479, 0.044715
    %v1487 = vmul.f32 %v1482, 0.044715
    %v1488 = vmul.f32 %v1486, %v1479
    %v1489 = vmul.f32 %v1487, %v1482
    %v1490 = vmul.f32 %v1488, %v1479
    %v1491 = vmul.f32 %v1489, %v1482
    %v1492 = vadd.f32 %v1479, %v1490
    %v1493 = vadd.f32 %v1482, %v1491
    %v1494 = vmul.f32 %v1492, 0.7978846
    %v1495 = vmul.f32 %v1493, 0.7978846
    %v1496 = vtanh.pop %v1494
    %v1497 = vtanh.pop %v1495
    %v1498 = vadd.f32 %v1496, 1.0
    %v1499 = vadd.f32 %v1497, 1.0
    %v1500 = vmul.f32 %v1484, %v1498
    %v1501 = vmul.f32 %v1485, %v1499
    %v1502 = vperm.slane %v892, 7
    %v1504 = vsel %vm785, %v1500, 0
    %v1507 = vsel %vm785, %v1501, 0
    %1509 = vmatpush.msra.mxu0 0.0
    %1510 = vmatpush.msra.mxu0 0.0
    %1511 = vmatpush.msra.mxu0 0.0
    %1512 = vmatpush.msra.mxu0 0.0
    %1513 = vmatpush.msra.mxu0 0.0
    %1514 = vmatpush.msra.mxu0 0.0
    %1515 = vmatpush.msra.mxu0 0.0
    %1516 = vmatpush.msra.mxu0 0.0
    %1517 = vmatpush.msra.mxu0 %v890
    %1518 = vmatpush.msra.mxu0 %v889
    %1519 = vmatpush.msra.mxu0 %v888
    %1520 = vmatpush.msra.mxu0 %v887
    %1521 = vmatpush.msra.mxu0 %v886
    %1522 = vmatpush.msra.mxu0 %v885
    %1523 = vmatpush.msra.mxu0 %v884
    %1524 = vmatpush.msra.mxu0 %v883
    %1525 = vmatmul.f32.gmra.mxu0 %v1504
    %v1526 = vpop.f32.mrf.mxu0
    %v1527 = vadd.f32 %v1502, %v1526
    %1528 = vmatmul.f32.gmra.mxu0 %v1507
    %v1529 = vpop.f32.mrf.mxu0
    %v1530 = vadd.f32 %v1502, %v1529
    %1531 = vdwg.mxu0
    %v1532 = vadd.f32 %v1527, %v1452
    %v1533 = vadd.f32 %v1530, %v1453
    %v1534 = vsel %vm91, %v1532, 0.0
    %1535 = vadd.xlane.f32.xlu0 %v1534
    %v1536 = vpop.xlane.xlu0 %1535
    %v1537 = vsel %vm91, %v1533, 0.0
    %1538 = vadd.xlane.f32.xlu0 %v1537
    %v1539 = vpop.xlane.xlu0 %1538
    %v1540 = vmul.f32 %v1536, %v104
    %v1541 = vmul.f32 %v1539, %v104
    %v1542 = vsub.f32 %v1532, %v1540
    %v1543 = vsub.f32 %v1533, %v1541
    %v1544 = vmul.f32 %v1542, %v1542
    %v1545 = vmul.f32 %v1543, %v1543
    %v1546 = vsel %vm91, %v1544, 0.0
    %1547 = vadd.xlane.f32.xlu0 %v1546
    %v1548 = vpop.xlane.xlu0 %1547
    %v1549 = vsel %vm91, %v1545, 0.0
    %1550 = vadd.xlane.f32.xlu0 %v1549
    %v1551 = vpop.xlane.xlu0 %1550
    %v1552 = vmul.f32 %v1548, %v104
    %v1553 = vmul.f32 %v1551, %v104
    %v1554 = vadd.f32 %v1552, 1e-12
    %v1555 = vadd.f32 %v1553, 1e-12
    %v1556 = vrsqrt.pop %v1554
    %v1557 = vmul.f32 %v1556, %v1554
    %v1558 = vmul.f32 %v1557, %v1556
    %v1559 = vmul.f32 0.5, %v1558
    %v1560 = vsub.f32 1.5, %v1559
    %v1561 = vmul.f32 %v1556, %v1560
    %vm1562 = vweird.f32 %v1554
    %vm1563 = vweird.f32 %v1556
    %vm1564 = vmor %vm1562, %vm1563
    %v1565 = vsel %vm1564, %v1556, %v1561
    %v1566 = vrsqrt.pop %v1555
    %v1567 = vmul.f32 %v1566, %v1555
    %v1568 = vmul.f32 %v1567, %v1566
    %v1569 = vmul.f32 0.5, %v1568
    %v1570 = vsub.f32 1.5, %v1569
    %v1571 = vmul.f32 %v1566, %v1570
    %vm1572 = vweird.f32 %v1555
    %vm1573 = vweird.f32 %v1566
    %vm1574 = vmor %vm1572, %vm1573
    %v1575 = vsel %vm1574, %v1566, %v1571
    %v1576 = vmul.f32 %v1542, %v1565
    %v1577 = vmul.f32 %v1543, %v1575
    %v1578 = vperm.slane %v893, 0
    %v1579 = vmul.f32 %v1576, %v1578
    %v1580 = vmul.f32 %v1577, %v1578
    %v1581 = vperm.slane %v893, 1
    %v1582 = vadd.f32 %v1579, %v1581
    %v1583 = vadd.f32 %v1580, %v1581
    %v1585 = vrot.slane %v1583, 7
    %vm1587 = vcmask 1040384
    %v1588 = vsel %vm1587, %v1582, %v1585
    %v1589 = vld [vmem:[%s4] sm:$0xff]
    %v1590 = vld [vmem:[%s4 + $0x8] sm:$0xff]
    %v1591 = vld [vmem:[%s4 + $0x10] sm:$0xff]
    %v1592 = vld [vmem:[%s4 + $0x18] sm:$0xff]
    %v1593 = vld [vmem:[%s5] sm:$0x1]
    %v1595 = vperm.slane %v1593, 0
    %v1598 = vsel %vm91, %v1588, 0
    %1600 = vmatpush.msra.mxu0 0.0
    %1601 = vmatpush.msra.mxu0 0.0
    %1602 = vmatpush.msra.mxu0 0.0
    %1603 = vmatpush.msra.mxu0 0.0
    %1604 = vmatpush.msra.mxu0 0.0
    %1605 = vmatpush.msra.mxu0 0.0
    %1606 = vmatpush.msra.mxu0 0.0
    %1607 = vmatpush.msra.mxu0 0.0
    %1608 = vmatpush.msra.mxu0 0.0
    %1609 = vmatpush.msra.mxu0 0.0
    %1610 = vmatpush.msra.mxu0 0.0
    %1611 = vmatpush.msra.mxu0 0.0
    %1612 = vmatpush.msra.mxu0 %v1592
    %1613 = vmatpush.msra.mxu0 %v1591
    %1614 = vmatpush.msra.mxu0 %v1590
    %1615 = vmatpush.msra.mxu0 %v1589
    %1616 = vmatmul.f32.gmra.mxu0 %v1598
    %v1617 = vpop.f32.mrf.mxu0
    %v1618 = vadd.f32 %v1595, %v1617
    %1619 = vdwg.mxu0
    %vm1620 = vcmask 9216
    %1621 = vst.msk [vmem:[#allocation8] sm:$0x3] %vm1620, %v1618
    %v1622 = vsel %vm1620, %v1618, -inf
    %1623 = vmax.xlane.f32.xlu0 %v1622
    %v1624 = vpop.xlane.xlu0 %1623
    %v1625 = vsub.f32 %v1618, %v1624
    %v1626 = vmul.f32 %v1625, 1.442695
    %v1627 = vpow.pop %v1626
    %v1628 = vsel %vm1620, %v1627, 0.0
    %1629 = vadd.xlane.f32.xlu0 %v1628
    %v1630 = vpop.xlane.xlu0 %1629
    %v1631 = vlog2.pop %v1630
    %v1632 = vmul.f32 %v1631, 0.6931472
    %v1633 = vadd.f32 %v1624, %v1632
    %v1634 = vld [vmem:[%s2] sm:$0x3]
    %v1635 = vmul.f32 %v1634, %v1618
    %v1636 = vsel %vm1620, %v1635, 0.0
    %1637 = vadd.xlane.f32.xlu0 %v1636
    %v1638 = vpop.xlane.xlu0 %1637
    %v1639 = vsub.f32 %v1633, %v1638
    %vm1640 = vcmask 1024
    %v1641 = vsel %vm1640, %v1639, 0.0
    %1642 = vadd.xlane.f32.xlu0 %v1641
    %v1643 = vpop.xlane.xlu0 %1642
    %v1644 = vrot.slane %v1643, 4
    %v1645 = vadd.f32 %v1643, %v1644
    %v1646 = vrot.slane %v1645, 2
    %v1647 = vadd.f32 %v1645, %v1646
    %v1648 = vrot.slane %v1647, 1
    %v1649 = vadd.f32 %v1647, %v1648
    %s1650 = vtos %v1649
    %v1651 = vrcp.pop 2.0
    %v1652 = vmul.f32 2.0, %v1651
    %v1653 = vsub.f32 1.0, %v1652
    %v1654 = vmul.f32 %v1651, %v1653
    %v1655 = vadd.f32 %v1651, %v1654
    %vm1656 = vweird.f32 %v1651
    %v1657 = vsel %vm1656, %v1651, %v1655
    %s1658 = vtos %v1657
    %s1659 = smul.f32 %s1650, %s1658
    %v1660 = vstv %s1659
    %vm1661 = vcmask 0
    %1662 = vst.msk [vmem:[#allocation9] sm:$0x1] %vm1661, %v1660
    // Predicated region
    $region58: #{tpu_custom_call.1} parent=1 // pred_check
      _
    $region59: #{tpu_custom_call.1} parent=1 // pred_check_branch
      %1664 = sbr.rel (0) target = $region61
    $region60: #{tpu_custom_call.1} parent=1 // pred_region
      %1666 = vsyncadd [#allocation4], 0
      %s1668 = sshll.u32 [#allocation8], 4
      %s1669 = int_to_ptr.vmem [resolvable:$true] %s1668
      %s1670 = sshll.u32 %s11, 4
      %s1671 = int_to_ptr.hbm [resolvable:$true] %s1670
      %1673 = dma.vmem_to_hbm [thread:$0]  %s1669, 32, %s1671, [#allocation4]
    $region61: #{tpu_custom_call.1} parent=1 // pred_fallthru
      _
    // Predicated region
    $region62: #{tpu_custom_call.1} parent=1 // pred_check
      _
    $region63: #{tpu_custom_call.1} parent=1 // pred_check_branch
      %1675 = sbr.rel (0) target = $region65
    $region64: #{tpu_custom_call.1} parent=1 // pred_region
      %1677 = vsyncadd [#allocation10], 0
      %s1679 = sshll.u32 [#allocation9], 4
      %s1680 = int_to_ptr.vmem [resolvable:$true] %s1679
      %s1681 = sshll.u32 %s12, 4
      %s1682 = int_to_ptr.hbm [resolvable:$true] %s1681
      %1684 = dma.vmem_to_hbm [thread:$0]  %s1680, 16, %s1682, [#allocation10]
    $region65: #{tpu_custom_call.1} parent=1 // pred_fallthru
      _
    // Predicated region
    $region66: #{tpu_custom_call.1} parent=1 // pred_check
      _
    $region67: #{tpu_custom_call.1} parent=1 // pred_check_branch
      %1686 = sbr.rel (0) target = $region69
    $region68: #{tpu_custom_call.1} parent=1 // pred_region
      %1688 = dma.done [#allocation4], 32
    $region69: #{tpu_custom_call.1} parent=1 // pred_fallthru
      _
    // Predicated region
    $region70: #{tpu_custom_call.1} parent=1 // pred_check
      _
    $region71: #{tpu_custom_call.1} parent=1 // pred_check_branch
      %1690 = sbr.rel (0) target = $region73
    $region72: #{tpu_custom_call.1} parent=1 // pred_region
      %1692 = dma.done [#allocation10], 16
    $region73: #{tpu_custom_call.1} parent=1 // pred_fallthru
      _
    %1693 = vsyncpa [#allocation3], 1
    %1694 = vsyncpa [#allocation6], 1
    %1695 = vsyncpa [#allocation4], 1
    %1696 = vsyncpa [#allocation10], 1

</llo_original>
